<compile_context>
chip_gen: v6e
topology: v6e:2x2x1
jax: 0.10.0
libtpu: 0.0.40
codegen_flags: <defaults>
</compile_context>

<pallas_src>
import math

import jax
import jax.numpy as jnp
from jax.experimental import pallas as pl
from jax.experimental.pallas import tpu as pltpu

# ---------------------------------------------------------------------------
# SIREN hyper-parameters (small, synthetic config consistent with SIREN.py)
# ---------------------------------------------------------------------------
DIM_IN = 2         # 2-D coordinates
DIM_HIDDEN = 32
DIM_OUT = 3        # e.g. RGB
W0_INITIAL = 30.0
W0 = 1.0

N_POINTS = 256     # number of query positions (demo size)
LANE = 128         # TPU lane width
MAX_TILE_N = 16384 # points per grid step; ~2 MB per (32 x TILE_N) f32 temp
VMEM_LIMIT_BYTES = 32 * 1024 * 1024  # raise v5e's 16 MiB default scoped limit


# ---------------------------------------------------------------------------
# Pallas kernel: fused SIREN MLP over a lane-dense tile of points
# ---------------------------------------------------------------------------
def siren_mlp_kernel(x_ref, w1_ref, b1_ref, w2_ref, b2_ref, w3_ref, b3_ref,
                     o_ref):
    x = x_ref[...]                        # (DIM_IN, TILE_N)   points on lanes
    w1 = w1_ref[...]                      # (DIM_HIDDEN, DIM_IN), w0 pre-folded

    # layer 1: K=DIM_IN contraction as VPU broadcast FMAs (skip the MXU pass).
    # TODO(synk): the (1,TILE_N)->(32,TILE_N) sublane replicate could instead
    # use a stride-0 broadcast load (x_ref[pl.ds(k, 32, stride=0), :]) to move
    # it into the idle vld slot; kept as implicit broadcast (<=2% of VALU work)
    # to avoid any lowering risk.
    z = w1[:, 0:1] * x[0:1, :]            # (DIM_HIDDEN, TILE_N) outer product
    for k in range(1, DIM_IN):            # static unroll, DIM_IN is tiny
        z = z + w1[:, k:k + 1] * x[k:k + 1, :]
    h = jnp.sin(z + b1_ref[...])          # bias (DIM_HIDDEN, 1) lane-broadcast

    # layers 2/3 stay on the MXU (the binding slot is VALU on the two sin
    # polynomial evaluations; the 32-wide contractions overlap underneath).
    # HIGHEST precision keeps the f32 accumulation exact vs. the reference.
    z = jnp.dot(w2_ref[...], h, preferred_element_type=jnp.float32,
                precision=jax.lax.Precision.HIGHEST)
    h = jnp.sin(z + b2_ref[...])          # (DIM_HIDDEN, TILE_N)

    # final linear layer (no activation, no modulation: mods=None)
    out = jnp.dot(w3_ref[...], h, preferred_element_type=jnp.float32,
                  precision=jax.lax.Precision.HIGHEST)
    o_ref[...] = (out + b3_ref[...]).astype(o_ref.dtype)   # (DIM_OUT, TILE_N)


# ---------------------------------------------------------------------------
# One-time parameter transform: transpose to feature-major + fold w0 scales
# ---------------------------------------------------------------------------
def prepare_siren_params(params):
    w1, b1, w2, b2, w3, b3 = params
    return (
        (W0_INITIAL * w1).T, (W0_INITIAL * b1).T,   # (H, DIM_IN), (H, 1)
        (W0 * w2).T, (W0 * b2).T,                   # (H, H), (H, 1)  (W0 == 1)
        w3.T, b3.T,                                 # (DIM_OUT, H), (DIM_OUT, 1)
    )


def _choose_tile_n(n):
    """Pick the point-tile size (static, from shapes).

    - Rounded to 128 lanes.
    - At least 2 grid steps whenever there are >= 2 lane-chunks of points, so
      the "parallel" grid axis shards across v7x's two TensorCores (harmless
      ~0.35 us extra on single-TC chips).
    - Capped at MAX_TILE_N to bound VMEM temporaries and pad waste.
    """
    n128 = pl.cdiv(n, LANE) * LANE
    if n128 <= LANE:
        return LANE
    half = pl.cdiv(pl.cdiv(n128, 2), LANE) * LANE
    return min(MAX_TILE_N, half)


@jax.jit
def siren_forward_pallas(pos, params_t):
    """Runs the fused SIREN MLP kernel over all positions (lane-dense layout)."""
    w1t, b1t, w2t, b2t, w3t, b3t = params_t
    n, dim_in = pos.shape
    dim_out = w3t.shape[0]

    tile_n = _choose_tile_n(n)
    padded_n = pl.cdiv(n, tile_n) * tile_n
    n_steps = padded_n // tile_n

    # Lane-dense layout: points on the 128-lane axis (layout plumbing only).
    # Under jit the transpose + pad fuse into a single copy; pad waste is
    # bounded by < tile_n zero points in the last tile.
    x_t = pos.T                                              # (dim_in, n)
    if padded_n != n:
        x_t = jnp.pad(x_t, ((0, 0), (0, padded_n - n)))

    # Weights/biases: full blocks with constant index_map -> fetched once,
    # kept resident in VMEM across grid steps.
    full_block = lambda a: pl.BlockSpec(a.shape, lambda i: (0, 0))

    flops = 2 * (DIM_IN * DIM_HIDDEN
                 + DIM_HIDDEN * DIM_HIDDEN
                 + DIM_HIDDEN * DIM_OUT) * padded_n
    cost = pl.CostEstimate(
        flops=flops,
        transcendentals=2 * DIM_HIDDEN * padded_n,
        bytes_accessed=(dim_in + dim_out) * 4 * padded_n)

    out_t = pl.pallas_call(
        siren_mlp_kernel,
        out_shape=jax.ShapeDtypeStruct((dim_out, padded_n), jnp.float32),
        grid_spec=pltpu.PrefetchScalarGridSpec(
            num_scalar_prefetch=0,
            grid=(n_steps,),
            in_specs=[
                pl.BlockSpec((dim_in, tile_n), lambda i: (0, i)),   # pos^T tile
                full_block(w1t),
                full_block(b1t),
                full_block(w2t),
                full_block(b2t),
                full_block(w3t),
                full_block(b3t),
            ],
            out_specs=pl.BlockSpec((dim_out, tile_n), lambda i: (0, i)),
        ),
        compiler_params=pltpu.CompilerParams(
            dimension_semantics=("parallel",),
            vmem_limit_bytes=VMEM_LIMIT_BYTES),
        cost_estimate=cost,
    )(x_t, w1t, b1t, w2t, b2t, w3t, b3t)

    return out_t[:, :n].T                                    # (n, dim_out)


def flowing_wrapper_forward(pos, params_t, latent=None):
    """FlowingWrapper.forward: out = net(pos, mods=None); latent is ignored."""
    # self.modulator is None in __init__ and forward passes mods=None, so any
    # supplied latent would be silently dropped — assert loudly instead.
    assert latent is None, "FlowingWrapper ignores latent (modulator is None)"
    return siren_forward_pallas(pos, params_t)


# ---------------------------------------------------------------------------
# Deterministic SIREN-style parameter init (matches Siren layer init scheme)
# ---------------------------------------------------------------------------
def init_siren_params(key):
    k1, k2, k3 = jax.random.split(key, 3)

    def siren_uniform(k, fan_in, fan_out, w0, is_first):
        bound = (1.0 / fan_in) if is_first else math.sqrt(6.0 / fan_in) / w0
        kw, kb = jax.random.split(k)
        w = jax.random.uniform(kw, (fan_in, fan_out), jnp.float32, -bound, bound)
        b = jax.random.uniform(kb, (1, fan_out), jnp.float32, -bound, bound)
        return w, b

    w1, b1 = siren_uniform(k1, DIM_IN, DIM_HIDDEN, W0_INITIAL, is_first=True)
    w2, b2 = siren_uniform(k2, DIM_HIDDEN, DIM_HIDDEN, W0, is_first=False)
    w3, b3 = siren_uniform(k3, DIM_HIDDEN, DIM_OUT, W0, is_first=False)
    return (w1, b1, w2, b2, w3, b3)


def siren_forward_ref(pos, params):
    """Pure-JAX reference (original, unfused formulation) for correctness."""
    w1, b1, w2, b2, w3, b3 = params
    hp = jax.lax.Precision.HIGHEST   # keep the reference off the bf16 MXU path
    h = jnp.sin(W0_INITIAL * (jnp.dot(pos, w1, precision=hp) + b1))
    h = jnp.sin(W0 * (jnp.dot(h, w2, precision=hp) + b2))
    return jnp.dot(h, w3, precision=hp) + b3


if __name__ == "__main__":
    key = jax.random.PRNGKey(0)
    kparam, kpos = jax.random.split(key)

    params = init_siren_params(kparam)
    params_t = prepare_siren_params(params)   # one-time layout/scale transform
    # positions in [-1, 1], shape (N_POINTS, DIM_IN)
    pos = jax.random.uniform(kpos, (N_POINTS, DIM_IN), jnp.float32, -1.0, 1.0)

    out = flowing_wrapper_forward(pos, params_t, latent=None)
    out = jax.block_until_ready(out)

    ref = siren_forward_ref(pos, params)
    assert out.shape == (N_POINTS, DIM_OUT)
    # tolerance absorbs the (mathematically exact) w0-folding reassociation
    assert jnp.allclose(out, ref, atol=1e-4, rtol=1e-4), \
        float(jnp.max(jnp.abs(out - ref)))

    print("KERNEL_OK")
</pallas_src>

<mosaic_0001>
module attributes {stable_mosaic.version = 11 : i64} {
  func.func @siren_mlp_kernel(%arg0: i32, %arg1: memref<2x128xf32, #tpu.memory_space<vmem>>, %arg2: memref<32x2xf32, #tpu.memory_space<vmem>>, %arg3: memref<32x1xf32, #tpu.memory_space<vmem>>, %arg4: memref<32x32xf32, #tpu.memory_space<vmem>>, %arg5: memref<32x1xf32, #tpu.memory_space<vmem>>, %arg6: memref<3x32xf32, #tpu.memory_space<vmem>>, %arg7: memref<3x1xf32, #tpu.memory_space<vmem>>, %arg8: memref<3x128xf32, #tpu.memory_space<vmem>>) attributes {dimension_semantics = [#tpu.dimension_semantics<parallel>], iteration_bounds = array<i64: 2>, scalar_prefetch = 0 : i64, scratch_operands = 0 : i64, tpu.core_type = #tpu.core_type<tc>, window_params = [{transform_indices = @transform_0, window_bounds = array<i64: 2, 128>}, {pipeline_mode = #tpu.pipeline_mode<synchronous>, transform_indices = @transform_1, window_bounds = array<i64: 32, 2>}, {pipeline_mode = #tpu.pipeline_mode<synchronous>, transform_indices = @transform_2, window_bounds = array<i64: 32, 1>}, {pipeline_mode = #tpu.pipeline_mode<synchronous>, transform_indices = @transform_3, window_bounds = array<i64: 32, 32>}, {pipeline_mode = #tpu.pipeline_mode<synchronous>, transform_indices = @transform_4, window_bounds = array<i64: 32, 1>}, {pipeline_mode = #tpu.pipeline_mode<synchronous>, transform_indices = @transform_5, window_bounds = array<i64: 3, 32>}, {pipeline_mode = #tpu.pipeline_mode<synchronous>, transform_indices = @transform_6, window_bounds = array<i64: 3, 1>}, {transform_indices = @transform_7, window_bounds = array<i64: 3, 128>}]} {
    %c0 = arith.constant 0 : index
    %c0_0 = arith.constant 0 : index
    %0 = vector.load %arg1[%c0, %c0_0] : memref<2x128xf32, #tpu.memory_space<vmem>>, vector<2x128xf32>
    %c0_1 = arith.constant 0 : index
    %c0_2 = arith.constant 0 : index
    %1 = vector.load %arg2[%c0_1, %c0_2] : memref<32x2xf32, #tpu.memory_space<vmem>>, vector<32x2xf32>
    %2 = vector.extract_strided_slice %1 {offsets = [0, 0], sizes = [32, 1], strides = [1, 1]} : vector<32x2xf32> to vector<32x1xf32>
    %3 = vector.extract_strided_slice %0 {offsets = [0, 0], sizes = [1, 128], strides = [1, 1]} : vector<2x128xf32> to vector<1x128xf32>
    %4 = vector.broadcast %2 : vector<32x1xf32> to vector<32x128xf32>
    %5 = vector.broadcast %3 : vector<1x128xf32> to vector<32x128xf32>
    %6 = arith.mulf %4, %5 : vector<32x128xf32>
    %7 = vector.extract_strided_slice %1 {offsets = [0, 1], sizes = [32, 1], strides = [1, 1]} : vector<32x2xf32> to vector<32x1xf32>
    %8 = vector.extract_strided_slice %0 {offsets = [1, 0], sizes = [1, 128], strides = [1, 1]} : vector<2x128xf32> to vector<1x128xf32>
    %9 = vector.broadcast %7 : vector<32x1xf32> to vector<32x128xf32>
    %10 = vector.broadcast %8 : vector<1x128xf32> to vector<32x128xf32>
    %11 = arith.mulf %9, %10 : vector<32x128xf32>
    %12 = arith.addf %6, %11 : vector<32x128xf32>
    %c0_3 = arith.constant 0 : index
    %c0_4 = arith.constant 0 : index
    %13 = vector.load %arg3[%c0_3, %c0_4] : memref<32x1xf32, #tpu.memory_space<vmem>>, vector<32x1xf32>
    %14 = vector.broadcast %13 : vector<32x1xf32> to vector<32x128xf32>
    %15 = arith.addf %12, %14 : vector<32x128xf32>
    %16 = math.sin %15 : vector<32x128xf32>
    %c0_5 = arith.constant 0 : index
    %c0_6 = arith.constant 0 : index
    %17 = vector.load %arg4[%c0_5, %c0_6] : memref<32x32xf32, #tpu.memory_space<vmem>>, vector<32x32xf32>
    %cst = arith.constant dense<0.000000e+00> : vector<32x128xf32>
    %18 = tpu.matmul %17, %16, %cst {dimension_numbers = #tpu.dot_dimension_numbers<[1], [0], [0], [1], [0, 0, 1, 1], [], []>, precision = #tpu.contract_precision<fp32>} : vector<32x32xf32>, vector<32x128xf32>, vector<32x128xf32> -> vector<32x128xf32>
    %c0_7 = arith.constant 0 : index
    %c0_8 = arith.constant 0 : index
    %19 = vector.load %arg5[%c0_7, %c0_8] : memref<32x1xf32, #tpu.memory_space<vmem>>, vector<32x1xf32>
    %20 = vector.broadcast %19 : vector<32x1xf32> to vector<32x128xf32>
    %21 = arith.addf %18, %20 : vector<32x128xf32>
    %22 = math.sin %21 : vector<32x128xf32>
    %c0_9 = arith.constant 0 : index
    %c0_10 = arith.constant 0 : index
    %23 = vector.load %arg6[%c0_9, %c0_10] : memref<3x32xf32, #tpu.memory_space<vmem>>, vector<3x32xf32>
    %cst_11 = arith.constant dense<0.000000e+00> : vector<3x128xf32>
    %24 = tpu.matmul %23, %22, %cst_11 {dimension_numbers = #tpu.dot_dimension_numbers<[1], [0], [0], [1], [0, 0, 1, 1], [], []>, precision = #tpu.contract_precision<fp32>} : vector<3x32xf32>, vector<32x128xf32>, vector<3x128xf32> -> vector<3x128xf32>
    %c0_12 = arith.constant 0 : index
    %c0_13 = arith.constant 0 : index
    %25 = vector.load %arg7[%c0_12, %c0_13] : memref<3x1xf32, #tpu.memory_space<vmem>>, vector<3x1xf32>
    %26 = vector.broadcast %25 : vector<3x1xf32> to vector<3x128xf32>
    %27 = arith.addf %24, %26 : vector<3x128xf32>
    %c0_14 = arith.constant 0 : index
    %c0_15 = arith.constant 0 : index
    %28 = vector.load %arg8[%c0_14, %c0_15] : memref<3x128xf32, #tpu.memory_space<vmem>>, vector<3x128xf32>
    tpu.vector_store %arg8[%c0_14, %c0_15], %27 {strides = array<i32>} : memref<3x128xf32, #tpu.memory_space<vmem>>, vector<3x128xf32>,
    return
  }
  func.func @transform_0(%arg0: i32) -> (i32, i32) {
    %c0_i32 = arith.constant 0 : i32
    %c0_i32_0 = arith.constant 0 : i32
    return %c0_i32, %arg0 : i32, i32
  }
  func.func @transform_1(%arg0: i32) -> (i32, i32) {
    %c0_i32 = arith.constant 0 : i32
    %c0_i32_0 = arith.constant 0 : i32
    %c0_i32_1 = arith.constant 0 : i32
    return %c0_i32, %c0_i32_0 : i32, i32
  }
  func.func @transform_2(%arg0: i32) -> (i32, i32) {
    %c0_i32 = arith.constant 0 : i32
    %c0_i32_0 = arith.constant 0 : i32
    %c0_i32_1 = arith.constant 0 : i32
    return %c0_i32, %c0_i32_0 : i32, i32
  }
  func.func @transform_3(%arg0: i32) -> (i32, i32) {
    %c0_i32 = arith.constant 0 : i32
    %c0_i32_0 = arith.constant 0 : i32
    %c0_i32_1 = arith.constant 0 : i32
    return %c0_i32, %c0_i32_0 : i32, i32
  }
  func.func @transform_4(%arg0: i32) -> (i32, i32) {
    %c0_i32 = arith.constant 0 : i32
    %c0_i32_0 = arith.constant 0 : i32
    %c0_i32_1 = arith.constant 0 : i32
    return %c0_i32, %c0_i32_0 : i32, i32
  }
  func.func @transform_5(%arg0: i32) -> (i32, i32) {
    %c0_i32 = arith.constant 0 : i32
    %c0_i32_0 = arith.constant 0 : i32
    %c0_i32_1 = arith.constant 0 : i32
    return %c0_i32, %c0_i32_0 : i32, i32
  }
  func.func @transform_6(%arg0: i32) -> (i32, i32) {
    %c0_i32 = arith.constant 0 : i32
    %c0_i32_0 = arith.constant 0 : i32
    %c0_i32_1 = arith.constant 0 : i32
    return %c0_i32, %c0_i32_0 : i32, i32
  }
  func.func @transform_7(%arg0: i32) -> (i32, i32) {
    %c0_i32 = arith.constant 0 : i32
    %c0_i32_0 = arith.constant 0 : i32
    return %c0_i32, %arg0 : i32, i32
  }
}

</mosaic_0001>

<llo_original>
// kernel: siren_forward_pallas.1
$region0: #{siren_forward_pallas.1}
  #allocation0 [shape = 'u32[]', space=smem, size = 0x4, offset = 0x4, fixed_abs, tag = 'smem constant byte address 0x4 - core index']
  #allocation1 [shape = 'u32[144,128]{1,0:T(1,128)}', space=vmem, size = 0x12000, scoped, tag = 'internal scratch']
  %s0 = inlined_call_operand.vmem [shape: f32[2,256], index: 0, kind: input, shape index: {}]
  %s1 = inlined_call_operand.vmem [shape: f32[32,2], index: 1, kind: input, shape index: {}]
  %s2 = inlined_call_operand.vmem [shape: f32[32,1], index: 2, kind: input, shape index: {}]
  %s3 = inlined_call_operand.vmem [shape: f32[32,32], index: 3, kind: input, shape index: {}]
  %s4 = inlined_call_operand.vmem [shape: f32[32,1], index: 4, kind: input, shape index: {}]
  %s5 = inlined_call_operand.vmem [shape: f32[3,32], index: 5, kind: input, shape index: {}]
  %s6 = inlined_call_operand.vmem [shape: f32[3,1], index: 6, kind: input, shape index: {}]
  %s7 = inlined_call_operand.hbm [shape: f32[3,256], index: 7, kind: output, shape index: {}]
  %s8 = sld [smem:[#allocation0]]
  $region61: #{siren_forward_pallas.1} parent=0
    _
  %s10 = ssub.s32 1, %s8
  %s11 = scalar_select 0, %s10, %s8
  $region1: #{siren_forward_pallas.1} parent=0
    #allocation2 [shape = 'u8[4096]{0}', space=vmem, size = 0x1000, scoped, tag = 'output window, operand 0']
    #allocation3 [shape = 's32[2]{0}', space=sflag, size = 0x8, scoped, tag = 'scoped memory for siren_forward_pallas.1']
    %12 = vsyncpa [#allocation3], 0
    %s13 = scalar_lea.sflag [#allocation3], 1
    %14 = vsyncpa %s13, 0
    loop: start=0, step=1, limit=4
    $region2: #{siren_forward_pallas.1} parent=1 // loop_pre_header
      _
    $region3: #{siren_forward_pallas.1} parent=1 // loop_header
      %s16 = sphi 0, %s20
      %p17 = scmp.ge.s32.totalorder %s16, 4
      %s26 = sphi 0, %s28
      %s29 = sphi 0, %s26
      %s30 = sphi 0, %s29
      %s46 = sphi 0, %s30
      %s50 = sphi 0, %s50
      %s52 = sphi 0, %s50
      %s53 = sphi 0, %s52
      %s67 = sphi 0, %s53
      %s71 = sphi 0, %s71
      %s73 = sphi 0, %s71
      %s74 = sphi 0, %s73
      %s88 = sphi 0, %s74
      %s92 = sphi 0, %s92
      %s94 = sphi 0, %s92
      %s95 = sphi 0, %s94
      %s109 = sphi 0, %s95
      %s113 = sphi 0, %s113
      %s115 = sphi 0, %s113
      %s116 = sphi 0, %s115
      %s130 = sphi 0, %s116
      %s134 = sphi 0, %s134
      %s136 = sphi 0, %s134
      %s137 = sphi 0, %s136
      %s151 = sphi 0, %s137
      %s155 = sphi 0, %s155
      %s157 = sphi 0, %s155
      %s158 = sphi 0, %s157
      %s172 = sphi 0, %s158
      %s178 = sphi 0, %s180
      %s181 = sphi 0, %s178
      %s182 = sphi 0, %s181
      %s198 = sphi 0, %s182
    $region4: #{siren_forward_pallas.1} parent=1 // loop_header_branch
      %19 = sbr.rel (%p17) target = $region8
    $region5: #{siren_forward_pallas.1} parent=1 // loop_body
      %s21 = ssub.s32 %s16, 1
      %s22 = ssub.s32 %s16, 2
      %s23 = sadd.s32 %s16, 1
      %s24 = ssub.s32 %s16, %s23
      %p25 = scmp.eq.s32.totalorder %s24, 0
      %s27 = sadd.s32 %s26, 1
      %s28 = scalar_select %p25, %s26, %s27
      %p31 = pneg %p25
      %p32 = scmp.eq.s32.totalorder %s16, 1
      %p33 = por %p31, %p32
      %p34 = scmp.ne.s32.totalorder %s26, %s29
      %p35 = scmp.eq.s32.totalorder %s16, 0
      %p36 = por %p34, %p35
      %p37 = scmp.ne.s32.totalorder %s26, %s29
      %p38 = scmp.eq.s32.totalorder %s21, 1
      %p39 = por %p37, %p38
      %p40 = scmp.ne.s32.totalorder %s29, %s30
      %p41 = scmp.eq.s32.totalorder %s21, 0
      %p42 = por %p40, %p41
      %p43 = scmp.ne.s32.totalorder %s29, %s30
      %p44 = scmp.eq.s32.totalorder %s22, 1
      %p45 = por %p43, %p44
      %p47 = scmp.ne.s32.totalorder %s30, %s46
      %p48 = scmp.eq.s32.totalorder %s22, 0
      %p49 = por %p47, %p48
      %s51 = sadd.s32 %s50, 1
      %p54 = scmp.eq.s32.totalorder %s16, 1
      %p55 = scmp.ne.s32.totalorder %s50, %s52
      %p56 = scmp.eq.s32.totalorder %s16, 0
      %p57 = por %p55, %p56
      %p58 = scmp.ne.s32.totalorder %s50, %s52
      %p59 = scmp.eq.s32.totalorder %s21, 1
      %p60 = por %p58, %p59
      %p61 = scmp.ne.s32.totalorder %s52, %s53
      %p62 = scmp.eq.s32.totalorder %s21, 0
      %p63 = por %p61, %p62
      %p64 = scmp.ne.s32.totalorder %s52, %s53
      %p65 = scmp.eq.s32.totalorder %s22, 1
      %p66 = por %p64, %p65
      %p68 = scmp.ne.s32.totalorder %s53, %s67
      %p69 = scmp.eq.s32.totalorder %s22, 0
      %p70 = por %p68, %p69
      %s72 = sadd.s32 %s71, 1
      %p75 = scmp.eq.s32.totalorder %s16, 1
      %p76 = scmp.ne.s32.totalorder %s71, %s73
      %p77 = scmp.eq.s32.totalorder %s16, 0
      %p78 = por %p76, %p77
      %p79 = scmp.ne.s32.totalorder %s71, %s73
      %p80 = scmp.eq.s32.totalorder %s21, 1
      %p81 = por %p79, %p80
      %p82 = scmp.ne.s32.totalorder %s73, %s74
      %p83 = scmp.eq.s32.totalorder %s21, 0
      %p84 = por %p82, %p83
      %p85 = scmp.ne.s32.totalorder %s73, %s74
      %p86 = scmp.eq.s32.totalorder %s22, 1
      %p87 = por %p85, %p86
      %p89 = scmp.ne.s32.totalorder %s74, %s88
      %p90 = scmp.eq.s32.totalorder %s22, 0
      %p91 = por %p89, %p90
      %s93 = sadd.s32 %s92, 1
      %p96 = scmp.eq.s32.totalorder %s16, 1
      %p97 = scmp.ne.s32.totalorder %s92, %s94
      %p98 = scmp.eq.s32.totalorder %s16, 0
      %p99 = por %p97, %p98
      %p100 = scmp.ne.s32.totalorder %s92, %s94
      %p101 = scmp.eq.s32.totalorder %s21, 1
      %p102 = por %p100, %p101
      %p103 = scmp.ne.s32.totalorder %s94, %s95
      %p104 = scmp.eq.s32.totalorder %s21, 0
      %p105 = por %p103, %p104
      %p106 = scmp.ne.s32.totalorder %s94, %s95
      %p107 = scmp.eq.s32.totalorder %s22, 1
      %p108 = por %p106, %p107
      %p110 = scmp.ne.s32.totalorder %s95, %s109
      %p111 = scmp.eq.s32.totalorder %s22, 0
      %p112 = por %p110, %p111
      %s114 = sadd.s32 %s113, 1
      %p117 = scmp.eq.s32.totalorder %s16, 1
      %p118 = scmp.ne.s32.totalorder %s113, %s115
      %p119 = scmp.eq.s32.totalorder %s16, 0
      %p120 = por %p118, %p119
      %p121 = scmp.ne.s32.totalorder %s113, %s115
      %p122 = scmp.eq.s32.totalorder %s21, 1
      %p123 = por %p121, %p122
      %p124 = scmp.ne.s32.totalorder %s115, %s116
      %p125 = scmp.eq.s32.totalorder %s21, 0
      %p126 = por %p124, %p125
      %p127 = scmp.ne.s32.totalorder %s115, %s116
      %p128 = scmp.eq.s32.totalorder %s22, 1
      %p129 = por %p127, %p128
      %p131 = scmp.ne.s32.totalorder %s116, %s130
      %p132 = scmp.eq.s32.totalorder %s22, 0
      %p133 = por %p131, %p132
      %s135 = sadd.s32 %s134, 1
      %p138 = scmp.eq.s32.totalorder %s16, 1
      %p139 = scmp.ne.s32.totalorder %s134, %s136
      %p140 = scmp.eq.s32.totalorder %s16, 0
      %p141 = por %p139, %p140
      %p142 = scmp.ne.s32.totalorder %s134, %s136
      %p143 = scmp.eq.s32.totalorder %s21, 1
      %p144 = por %p142, %p143
      %p145 = scmp.ne.s32.totalorder %s136, %s137
      %p146 = scmp.eq.s32.totalorder %s21, 0
      %p147 = por %p145, %p146
      %p148 = scmp.ne.s32.totalorder %s136, %s137
      %p149 = scmp.eq.s32.totalorder %s22, 1
      %p150 = por %p148, %p149
      %p152 = scmp.ne.s32.totalorder %s137, %s151
      %p153 = scmp.eq.s32.totalorder %s22, 0
      %p154 = por %p152, %p153
      %s156 = sadd.s32 %s155, 1
      %p159 = scmp.eq.s32.totalorder %s16, 1
      %p160 = scmp.ne.s32.totalorder %s155, %s157
      %p161 = scmp.eq.s32.totalorder %s16, 0
      %p162 = por %p160, %p161
      %p163 = scmp.ne.s32.totalorder %s155, %s157
      %p164 = scmp.eq.s32.totalorder %s21, 1
      %p165 = por %p163, %p164
      %p166 = scmp.ne.s32.totalorder %s157, %s158
      %p167 = scmp.eq.s32.totalorder %s21, 0
      %p168 = por %p166, %p167
      %p169 = scmp.ne.s32.totalorder %s157, %s158
      %p170 = scmp.eq.s32.totalorder %s22, 1
      %p171 = por %p169, %p170
      %p173 = scmp.ne.s32.totalorder %s158, %s172
      %p174 = scmp.eq.s32.totalorder %s22, 0
      %p175 = por %p173, %p174
      %s176 = ssub.s32 %s16, %s23
      %p177 = scmp.eq.s32.totalorder %s176, 0
      %s179 = sadd.s32 %s178, 1
      %s180 = scalar_select %p177, %s178, %s179
      %p183 = pneg %p177
      %p184 = scmp.eq.s32.totalorder %s16, 1
      %p185 = por %p183, %p184
      %p186 = scmp.ne.s32.totalorder %s178, %s181
      %p187 = scmp.eq.s32.totalorder %s16, 0
      %p188 = por %p186, %p187
      %p189 = scmp.ne.s32.totalorder %s178, %s181
      %p190 = scmp.eq.s32.totalorder %s21, 1
      %p191 = por %p189, %p190
      %p192 = scmp.ne.s32.totalorder %s181, %s182
      %p193 = scmp.eq.s32.totalorder %s21, 0
      %p194 = por %p192, %p193
      %p195 = scmp.ne.s32.totalorder %s181, %s182
      %p196 = scmp.eq.s32.totalorder %s22, 1
      %p197 = por %p195, %p196
      %p199 = scmp.ne.s32.totalorder %s182, %s198
      %p200 = scmp.eq.s32.totalorder %s22, 0
      %p201 = por %p199, %p200
      %p202 = scmp.le.s32.totalorder 1, %s16
      %p203 = scmp.lt.s32.totalorder %s16, 3
      %p204 = pnand %p202, %p203
      %p205 = pneg %p204
      // Predicated region
      $region9: #{siren_forward_pallas.1} parent=5 // pred_check
        _
      $region10: #{siren_forward_pallas.1} parent=5 // pred_check_branch
        %207 = sbr.rel (%p204) target = $region12
      $region11: #{siren_forward_pallas.1} parent=5 // pred_region
        %s208 = ssub.s32 %s16, 1
        // Predicated region
        $region13: #{siren_forward_pallas.1} parent=11 // pred_check
          %p209 = pneg %p63
        $region14: #{siren_forward_pallas.1} parent=11 // pred_check_branch
          %211 = sbr.rel (%p209) target = $region16
        $region15: #{siren_forward_pallas.1} parent=11 // pred_region
          _
        $region16: #{siren_forward_pallas.1} parent=11 // pred_fallthru
          _
        // Predicated region
        $region17: #{siren_forward_pallas.1} parent=11 // pred_check
          %p212 = pneg %p84
        $region18: #{siren_forward_pallas.1} parent=11 // pred_check_branch
          %214 = sbr.rel (%p212) target = $region20
        $region19: #{siren_forward_pallas.1} parent=11 // pred_region
          _
        $region20: #{siren_forward_pallas.1} parent=11 // pred_fallthru
          _
        // Predicated region
        $region21: #{siren_forward_pallas.1} parent=11 // pred_check
          %p215 = pneg %p105
        $region22: #{siren_forward_pallas.1} parent=11 // pred_check_branch
          %217 = sbr.rel (%p215) target = $region24
        $region23: #{siren_forward_pallas.1} parent=11 // pred_region
          _
        $region24: #{siren_forward_pallas.1} parent=11 // pred_fallthru
          _
        // Predicated region
        $region25: #{siren_forward_pallas.1} parent=11 // pred_check
          %p218 = pneg %p126
        $region26: #{siren_forward_pallas.1} parent=11 // pred_check_branch
          %220 = sbr.rel (%p218) target = $region28
        $region27: #{siren_forward_pallas.1} parent=11 // pred_region
          _
        $region28: #{siren_forward_pallas.1} parent=11 // pred_fallthru
          _
        // Predicated region
        $region29: #{siren_forward_pallas.1} parent=11 // pred_check
          %p221 = pneg %p147
        $region30: #{siren_forward_pallas.1} parent=11 // pred_check_branch
          %223 = sbr.rel (%p221) target = $region32
        $region31: #{siren_forward_pallas.1} parent=11 // pred_region
          _
        $region32: #{siren_forward_pallas.1} parent=11 // pred_fallthru
          _
        // Predicated region
        $region33: #{siren_forward_pallas.1} parent=11 // pred_check
          %p224 = pneg %p168
        $region34: #{siren_forward_pallas.1} parent=11 // pred_check_branch
          %226 = sbr.rel (%p224) target = $region36
        $region35: #{siren_forward_pallas.1} parent=11 // pred_region
          _
        $region36: #{siren_forward_pallas.1} parent=11 // pred_fallthru
          _
      $region12: #{siren_forward_pallas.1} parent=5 // pred_fallthru
        _
      %p227 = scmp.lt.s32.totalorder %s16, 2
      // Predicated region
      $region37: #{siren_forward_pallas.1} parent=5 // pred_check
        %p228 = pneg %p227
      $region38: #{siren_forward_pallas.1} parent=5 // pred_check_branch
        %230 = sbr.rel (%p228) target = $region40
      $region39: #{siren_forward_pallas.1} parent=5 // pred_region
        // Predicated region
        $region41: #{siren_forward_pallas.1} parent=39 // pred_check
          %p231 = pneg %p36
        $region42: #{siren_forward_pallas.1} parent=39 // pred_check_branch
          %233 = sbr.rel (%p231) target = $region44
        $region43: #{siren_forward_pallas.1} parent=39 // pred_region
          %p234 = scmp.lt.s32.totalorder %s16, 1
          %s235 = scalar_select %p234, %s16, 1
          %s236 = smul.addr %s235, 2
          %s237 = scalar_lea.vmem %s0, %s236
        $region44: #{siren_forward_pallas.1} parent=39 // pred_fallthru
          _
      $region40: #{siren_forward_pallas.1} parent=5 // pred_fallthru
        _
      %p238 = scmp.le.s32.totalorder 1, %s16
      %p239 = scmp.lt.s32.totalorder %s16, 3
      %p240 = pnand %p238, %p239
      %p241 = pneg %p240
      // Predicated region
      $region45: #{siren_forward_pallas.1} parent=5 // pred_check
        _
      $region46: #{siren_forward_pallas.1} parent=5 // pred_check_branch
        %243 = sbr.rel (%p240) target = $region48
      $region47: #{siren_forward_pallas.1} parent=5 // pred_region
        %s244 = ssub.s32 %s16, 1
        %p245 = scmp.lt.s32.totalorder %s21, 1
        %s246 = scalar_select %p245, %s21, 1
        %s247 = smul.addr %s246, 2
        %s248 = scalar_lea.vmem %s0, %s247
        %p249 = pneg %p42
        %p250 = pneg %p39
        %p251 = pneg %p63
        %p252 = pneg %p60
        %p253 = pneg %p84
        %p254 = pneg %p81
        %p255 = pneg %p105
        %p256 = pneg %p102
        %p257 = pneg %p126
        %p258 = pneg %p123
        %p259 = pneg %p147
        %p260 = pneg %p144
        %p261 = pneg %p168
        %p262 = pneg %p165
        %p263 = pneg %p194
        %p264 = pneg %p191
        %s265 = sand.u32 %s181, 1
        %s266 = scalar_lea.sflag [#allocation3], %s265
        %s267 = sand.u32 %s181, 1
        %s268 = smul.addr %s267, 4
        %s269 = scalar_lea.vmem [#allocation2], %s268
        %p270 = scmp.lt.s32.totalorder %s21, 1
        %s271 = scalar_select %p270, %s21, 1
        %s272 = smul.addr %s271, 2
        %s273 = scalar_lea.vmem %s0, %s272
        %v274 = vld [vmem:[%s273] sm:$0x3]
        %v275 = vld [vmem:[%s1] sm:$0xff]
        %v276 = vld [vmem:[%s1 + $0x8] sm:$0xff]
        %v277 = vld [vmem:[%s1 + $0x10] sm:$0xff]
        %v278 = vld [vmem:[%s1 + $0x18] sm:$0xff]
        %280 = vset.pattern.permute.xlu0 0
        %281 = vperm.xlu0 %280, %v275
        %v282 = vpop.permute.xlu0 %281
        %285 = vset.pattern.permute.xlu0 0
        %286 = vperm.xlu0 %285, %v276
        %v287 = vpop.permute.xlu0 %286
        %290 = vset.pattern.permute.xlu0 0
        %291 = vperm.xlu0 %290, %v277
        %v292 = vpop.permute.xlu0 %291
        %295 = vset.pattern.permute.xlu0 0
        %296 = vperm.xlu0 %295, %v278
        %v297 = vpop.permute.xlu0 %296
        %v299 = vlaneseq
        %v300 = vshrl.u32 %v299, 7
        %v301 = vsub.s32 0, %v300
        %v302 = vrot.slane %v274, %v301
        %v303 = vmul.f32 %v282, %v302
        %v304 = vmul.f32 %v287, %v302
        %v305 = vmul.f32 %v292, %v302
        %v306 = vmul.f32 %v297, %v302
        %307 = vset.pattern.permute.xlu0 1
        %308 = vperm.xlu0 %307, %v275
        %v309 = vpop.permute.xlu0 %308
        %311 = vset.pattern.permute.xlu0 1
        %312 = vperm.xlu0 %311, %v276
        %v313 = vpop.permute.xlu0 %312
        %315 = vset.pattern.permute.xlu0 1
        %316 = vperm.xlu0 %315, %v277
        %v317 = vpop.permute.xlu0 %316
        %319 = vset.pattern.permute.xlu0 1
        %320 = vperm.xlu0 %319, %v278
        %v321 = vpop.permute.xlu0 %320
        %v323 = vlaneseq
        %v324 = vshrl.u32 %v323, 7
        %v325 = vsub.s32 1, %v324
        %v326 = vrot.slane %v274, %v325
        %v327 = vmul.f32 %v309, %v326
        %v328 = vmul.f32 %v313, %v326
        %v329 = vmul.f32 %v317, %v326
        %v330 = vmul.f32 %v321, %v326
        %v331 = vadd.f32 %v303, %v327
        %v332 = vadd.f32 %v304, %v328
        %v333 = vadd.f32 %v305, %v329
        %v334 = vadd.f32 %v306, %v330
        %v335 = vld [vmem:[%s2] sm:$0xff]
        %v336 = vld [vmem:[%s2 + $0x8] sm:$0xff]
        %v337 = vld [vmem:[%s2 + $0x10] sm:$0xff]
        %v338 = vld [vmem:[%s2 + $0x18] sm:$0xff]
        %340 = vset.pattern.permute.xlu0 0
        %341 = vperm.xlu0 %340, %v335
        %v342 = vpop.permute.xlu0 %341
        %345 = vset.pattern.permute.xlu0 0
        %346 = vperm.xlu0 %345, %v336
        %v347 = vpop.permute.xlu0 %346
        %350 = vset.pattern.permute.xlu0 0
        %351 = vperm.xlu0 %350, %v337
        %v352 = vpop.permute.xlu0 %351
        %355 = vset.pattern.permute.xlu0 0
        %356 = vperm.xlu0 %355, %v338
        %v357 = vpop.permute.xlu0 %356
        %v359 = vadd.f32 %v331, %v342
        %v360 = vadd.f32 %v332, %v347
        %v361 = vadd.f32 %v333, %v352
        %v362 = vadd.f32 %v334, %v357
        %v363 = vand.u32 2147483647, %v359
        %vm364 = vcmp.le.f32.partialorder %v363, 0.7853982
        %vm365 = vcmp.lt.s32.totalorder %v359, 0
        %v366 = vand.u32 %v359, 2139095040
        %v367 = vshrl.u32 %v366, 23
        %v368 = vsub.s32 %v367, 127
        %v369 = vand.u32 2147483647, %v359
        %v370 = vand.u32 %v369, 8388607
        %v371 = vor.u32 %v370, 8388608
        %v372 = vsub.s32 0, %v371
        %v373 = vadd.s32 %v368, 1
        %vm374 = vcmp.gt.s32.totalorder %v373, 0
        %v375 = vsel %vm374, %v373, 0
        %v376 = vshrl.u32 %v375, 5
        %v377 = vand.u32 %v375, 31
        %v378 = vsub.s32 32, %v377
        %v379 = vshrl.u32 683565275, %v378
        %v380 = vshll.u32 683565275, %v377
        %v381 = vshrl.u32 2475754826, %v378
        %v382 = vor.u32 %v380, %v381
        %v383 = vshll.u32 2475754826, %v377
        %v384 = vshrl.u32 2131351028, %v378
        %v385 = vor.u32 %v383, %v384
        %v386 = vshll.u32 2131351028, %v377
        %v387 = vshrl.u32 2102212464, %v378
        %v388 = vor.u32 %v386, %v387
        %v389 = vshll.u32 2102212464, %v377
        %v390 = vshrl.u32 920167782, %v378
        %v391 = vor.u32 %v389, %v390
        %v392 = vshll.u32 920167782, %v377
        %v393 = vshrl.u32 1326507024, %v378
        %v394 = vor.u32 %v392, %v393
        %vm395 = vcmp.lt.s32.totalorder %v376, 1
        %vm396 = vcmp.lt.s32.totalorder %v376, 2
        %vm397 = vcmp.lt.s32.totalorder %v376, 3
        %vm398 = vcmp.lt.s32.totalorder %v376, 4
        %v399 = vsel %vm395, %v379, %v382
        %v400 = vsel %vm398, %v388, 2102212464
        %v401 = vsel %vm397, %v385, %v400
        %v402 = vsel %vm396, %v399, %v401
        %v403 = vsel %vm395, %v382, %v385
        %v404 = vsel %vm398, %v391, 920167782
        %v405 = vsel %vm397, %v388, %v404
        %v406 = vsel %vm396, %v403, %v405
        %v407 = vsel %vm395, %v385, %v388
        %v408 = vsel %vm398, %v394, 1326507024
        %v409 = vsel %vm397, %v391, %v408
        %v410 = vsel %vm396, %v407, %v409
        %v411 = vshll.u32 %v371, 8
        %v412 = vmul.u32.u64.compose %v411, %v410
        %v413 = vextract.low.u32 %v412
        %v414 = vextract.high.u32 %v412
        %v415 = vmul.u32.u64.compose %v411, %v406
        %v416 = vextract.low.u32 %v415
        %v417 = vextract.high.u32 %v415
        %v418 = vmul.u32 %v411, %v402
        %v419 = vadd.s32 %v414, %v416
        %vm420 = vc.u32 %v414, %v416
        %v421 = vadd.s32 %v417, 1
        %v422 = vsel %vm420, %v421, %v417
        %v423 = vadd.s32 %v418, %v422
        %v424 = vadd.s32 %v423, 536870912
        %v425 = vshrl.u32 %v424, 30
        %v426 = vshll.u32 %v425, 30
        %v427 = vsub.s32 %v423, %v426
        %vm428 = vcmp.lt.s32.totalorder %v427, 0
        %v429 = vsub.s32 0, %v427
        %v430 = vsel %vm428, %v429, %v427
        %v431 = vclz %v430
        %v432 = vsub.s32 %v431, 2
        %vm433 = vcmp.gt.s32.totalorder 0, %v432
        %v434 = vsel %vm433, 0, %v432
        %v435 = vsub.s32 32, %v434
        %v436 = vshll.u32 %v427, %v434
        %v437 = vshrl.u32 %v419, %v435
        %v438 = vor.u32 %v436, %v437
        %v439 = vsub.s32 4294967266, %v434
        %v440 = vadd.s32 %v439, 127
        %v441 = vshll.u32 %v440, 23
        %v442 = vor.u32 4788187, %v441
        %v443 = vand.u32 2147483647, %v442
        %v445 = vcvt.s32.f32 %v438
        %v446 = vmul.f32 %v445, %v443
        %v447 = vxor.u32 %v446, 2147483648
        %v448 = vsel %vm365, %v447, %v446
        %v449 = vsub.s32 4, %v425
        %v450 = vsel %vm365, %v449, %v425
        %v451 = vsel %vm364, %v359, %v448
        %v452 = vsel %vm364, 0, %v450
        %v453 = vcosq.f32.pop %v451
        %v454 = vsinq.f32.pop %v451
        %vm455 = vweird.f32 %v359
        %v456 = vadd.s32 %v452, 3
        %v457 = vand.u32 %v456, 3
        %vm458 = vcmp.lt.s32.totalorder %v457, 2
        %vm459 = vcmp.eq.s32.totalorder %v457, 0
        %v460 = vxor.u32 %v454, 2147483648
        %v461 = vsel %vm459, %v453, %v460
        %vm462 = vcmp.eq.s32.totalorder %v457, 2
        %v463 = vxor.u32 %v453, 2147483648
        %v464 = vsel %vm462, %v463, %v454
        %v465 = vsel %vm458, %v461, %v464
        %v466 = vsel %vm455, nan, %v465
        %v467 = vand.u32 2147483647, %v360
        %vm468 = vcmp.le.f32.partialorder %v467, 0.7853982
        %vm469 = vcmp.lt.s32.totalorder %v360, 0
        %v470 = vand.u32 %v360, 2139095040
        %v471 = vshrl.u32 %v470, 23
        %v472 = vsub.s32 %v471, 127
        %v473 = vand.u32 2147483647, %v360
        %v474 = vand.u32 %v473, 8388607
        %v475 = vor.u32 %v474, 8388608
        %v476 = vsub.s32 0, %v475
        %v477 = vadd.s32 %v472, 1
        %vm478 = vcmp.gt.s32.totalorder %v477, 0
        %v479 = vsel %vm478, %v477, 0
        %v480 = vshrl.u32 %v479, 5
        %v481 = vand.u32 %v479, 31
        %v482 = vsub.s32 32, %v481
        %v483 = vshrl.u32 683565275, %v482
        %v484 = vshll.u32 683565275, %v481
        %v485 = vshrl.u32 2475754826, %v482
        %v486 = vor.u32 %v484, %v485
        %v487 = vshll.u32 2475754826, %v481
        %v488 = vshrl.u32 2131351028, %v482
        %v489 = vor.u32 %v487, %v488
        %v490 = vshll.u32 2131351028, %v481
        %v491 = vshrl.u32 2102212464, %v482
        %v492 = vor.u32 %v490, %v491
        %v493 = vshll.u32 2102212464, %v481
        %v494 = vshrl.u32 920167782, %v482
        %v495 = vor.u32 %v493, %v494
        %v496 = vshll.u32 920167782, %v481
        %v497 = vshrl.u32 1326507024, %v482
        %v498 = vor.u32 %v496, %v497
        %vm499 = vcmp.lt.s32.totalorder %v480, 1
        %vm500 = vcmp.lt.s32.totalorder %v480, 2
        %vm501 = vcmp.lt.s32.totalorder %v480, 3
        %vm502 = vcmp.lt.s32.totalorder %v480, 4
        %v503 = vsel %vm499, %v483, %v486
        %v504 = vsel %vm502, %v492, 2102212464
        %v505 = vsel %vm501, %v489, %v504
        %v506 = vsel %vm500, %v503, %v505
        %v507 = vsel %vm499, %v486, %v489
        %v508 = vsel %vm502, %v495, 920167782
        %v509 = vsel %vm501, %v492, %v508
        %v510 = vsel %vm500, %v507, %v509
        %v511 = vsel %vm499, %v489, %v492
        %v512 = vsel %vm502, %v498, 1326507024
        %v513 = vsel %vm501, %v495, %v512
        %v514 = vsel %vm500, %v511, %v513
        %v515 = vshll.u32 %v475, 8
        %v516 = vmul.u32.u64.compose %v515, %v514
        %v517 = vextract.low.u32 %v516
        %v518 = vextract.high.u32 %v516
        %v519 = vmul.u32.u64.compose %v515, %v510
        %v520 = vextract.low.u32 %v519
        %v521 = vextract.high.u32 %v519
        %v522 = vmul.u32 %v515, %v506
        %v523 = vadd.s32 %v518, %v520
        %vm524 = vc.u32 %v518, %v520
        %v525 = vadd.s32 %v521, 1
        %v526 = vsel %vm524, %v525, %v521
        %v527 = vadd.s32 %v522, %v526
        %v528 = vadd.s32 %v527, 536870912
        %v529 = vshrl.u32 %v528, 30
        %v530 = vshll.u32 %v529, 30
        %v531 = vsub.s32 %v527, %v530
        %vm532 = vcmp.lt.s32.totalorder %v531, 0
        %v533 = vsub.s32 0, %v531
        %v534 = vsel %vm532, %v533, %v531
        %v535 = vclz %v534
        %v536 = vsub.s32 %v535, 2
        %vm537 = vcmp.gt.s32.totalorder 0, %v536
        %v538 = vsel %vm537, 0, %v536
        %v539 = vsub.s32 32, %v538
        %v540 = vshll.u32 %v531, %v538
        %v541 = vshrl.u32 %v523, %v539
        %v542 = vor.u32 %v540, %v541
        %v543 = vsub.s32 4294967266, %v538
        %v544 = vadd.s32 %v543, 127
        %v545 = vshll.u32 %v544, 23
        %v546 = vor.u32 4788187, %v545
        %v547 = vand.u32 2147483647, %v546
        %v549 = vcvt.s32.f32 %v542
        %v550 = vmul.f32 %v549, %v547
        %v551 = vxor.u32 %v550, 2147483648
        %v552 = vsel %vm469, %v551, %v550
        %v553 = vsub.s32 4, %v529
        %v554 = vsel %vm469, %v553, %v529
        %v555 = vsel %vm468, %v360, %v552
        %v556 = vsel %vm468, 0, %v554
        %v557 = vcosq.f32.pop %v555
        %v558 = vsinq.f32.pop %v555
        %vm559 = vweird.f32 %v360
        %v560 = vadd.s32 %v556, 3
        %v561 = vand.u32 %v560, 3
        %vm562 = vcmp.lt.s32.totalorder %v561, 2
        %vm563 = vcmp.eq.s32.totalorder %v561, 0
        %v564 = vxor.u32 %v558, 2147483648
        %v565 = vsel %vm563, %v557, %v564
        %vm566 = vcmp.eq.s32.totalorder %v561, 2
        %v567 = vxor.u32 %v557, 2147483648
        %v568 = vsel %vm566, %v567, %v558
        %v569 = vsel %vm562, %v565, %v568
        %v570 = vsel %vm559, nan, %v569
        %v571 = vand.u32 2147483647, %v361
        %vm572 = vcmp.le.f32.partialorder %v571, 0.7853982
        %vm573 = vcmp.lt.s32.totalorder %v361, 0
        %v574 = vand.u32 %v361, 2139095040
        %v575 = vshrl.u32 %v574, 23
        %v576 = vsub.s32 %v575, 127
        %v577 = vand.u32 2147483647, %v361
        %v578 = vand.u32 %v577, 8388607
        %v579 = vor.u32 %v578, 8388608
        %v580 = vsub.s32 0, %v579
        %v581 = vadd.s32 %v576, 1
        %vm582 = vcmp.gt.s32.totalorder %v581, 0
        %v583 = vsel %vm582, %v581, 0
        %v584 = vshrl.u32 %v583, 5
        %v585 = vand.u32 %v583, 31
        %v586 = vsub.s32 32, %v585
        %v587 = vshrl.u32 683565275, %v586
        %v588 = vshll.u32 683565275, %v585
        %v589 = vshrl.u32 2475754826, %v586
        %v590 = vor.u32 %v588, %v589
        %v591 = vshll.u32 2475754826, %v585
        %v592 = vshrl.u32 2131351028, %v586
        %v593 = vor.u32 %v591, %v592
        %v594 = vshll.u32 2131351028, %v585
        %v595 = vshrl.u32 2102212464, %v586
        %v596 = vor.u32 %v594, %v595
        %v597 = vshll.u32 2102212464, %v585
        %v598 = vshrl.u32 920167782, %v586
        %v599 = vor.u32 %v597, %v598
        %v600 = vshll.u32 920167782, %v585
        %v601 = vshrl.u32 1326507024, %v586
        %v602 = vor.u32 %v600, %v601
        %vm603 = vcmp.lt.s32.totalorder %v584, 1
        %vm604 = vcmp.lt.s32.totalorder %v584, 2
        %vm605 = vcmp.lt.s32.totalorder %v584, 3
        %vm606 = vcmp.lt.s32.totalorder %v584, 4
        %v607 = vsel %vm603, %v587, %v590
        %v608 = vsel %vm606, %v596, 2102212464
        %v609 = vsel %vm605, %v593, %v608
        %v610 = vsel %vm604, %v607, %v609
        %v611 = vsel %vm603, %v590, %v593
        %v612 = vsel %vm606, %v599, 920167782
        %v613 = vsel %vm605, %v596, %v612
        %v614 = vsel %vm604, %v611, %v613
        %v615 = vsel %vm603, %v593, %v596
        %v616 = vsel %vm606, %v602, 1326507024
        %v617 = vsel %vm605, %v599, %v616
        %v618 = vsel %vm604, %v615, %v617
        %v619 = vshll.u32 %v579, 8
        %v620 = vmul.u32.u64.compose %v619, %v618
        %v621 = vextract.low.u32 %v620
        %v622 = vextract.high.u32 %v620
        %v623 = vmul.u32.u64.compose %v619, %v614
        %v624 = vextract.low.u32 %v623
        %v625 = vextract.high.u32 %v623
        %v626 = vmul.u32 %v619, %v610
        %v627 = vadd.s32 %v622, %v624
        %vm628 = vc.u32 %v622, %v624
        %v629 = vadd.s32 %v625, 1
        %v630 = vsel %vm628, %v629, %v625
        %v631 = vadd.s32 %v626, %v630
        %v632 = vadd.s32 %v631, 536870912
        %v633 = vshrl.u32 %v632, 30
        %v634 = vshll.u32 %v633, 30
        %v635 = vsub.s32 %v631, %v634
        %vm636 = vcmp.lt.s32.totalorder %v635, 0
        %v637 = vsub.s32 0, %v635
        %v638 = vsel %vm636, %v637, %v635
        %v639 = vclz %v638
        %v640 = vsub.s32 %v639, 2
        %vm641 = vcmp.gt.s32.totalorder 0, %v640
        %v642 = vsel %vm641, 0, %v640
        %v643 = vsub.s32 32, %v642
        %v644 = vshll.u32 %v635, %v642
        %v645 = vshrl.u32 %v627, %v643
        %v646 = vor.u32 %v644, %v645
        %v647 = vsub.s32 4294967266, %v642
        %v648 = vadd.s32 %v647, 127
        %v649 = vshll.u32 %v648, 23
        %v650 = vor.u32 4788187, %v649
        %v651 = vand.u32 2147483647, %v650
        %v653 = vcvt.s32.f32 %v646
        %v654 = vmul.f32 %v653, %v651
        %v655 = vxor.u32 %v654, 2147483648
        %v656 = vsel %vm573, %v655, %v654
        %v657 = vsub.s32 4, %v633
        %v658 = vsel %vm573, %v657, %v633
        %v659 = vsel %vm572, %v361, %v656
        %v660 = vsel %vm572, 0, %v658
        %v661 = vcosq.f32.pop %v659
        %v662 = vsinq.f32.pop %v659
        %vm663 = vweird.f32 %v361
        %v664 = vadd.s32 %v660, 3
        %v665 = vand.u32 %v664, 3
        %vm666 = vcmp.lt.s32.totalorder %v665, 2
        %vm667 = vcmp.eq.s32.totalorder %v665, 0
        %v668 = vxor.u32 %v662, 2147483648
        %v669 = vsel %vm667, %v661, %v668
        %vm670 = vcmp.eq.s32.totalorder %v665, 2
        %v671 = vxor.u32 %v661, 2147483648
        %v672 = vsel %vm670, %v671, %v662
        %v673 = vsel %vm666, %v669, %v672
        %v674 = vsel %vm663, nan, %v673
        %v675 = vand.u32 2147483647, %v362
        %vm676 = vcmp.le.f32.partialorder %v675, 0.7853982
        %vm677 = vcmp.lt.s32.totalorder %v362, 0
        %v678 = vand.u32 %v362, 2139095040
        %v679 = vshrl.u32 %v678, 23
        %v680 = vsub.s32 %v679, 127
        %v681 = vand.u32 2147483647, %v362
        %v682 = vand.u32 %v681, 8388607
        %v683 = vor.u32 %v682, 8388608
        %v684 = vsub.s32 0, %v683
        %v685 = vadd.s32 %v680, 1
        %vm686 = vcmp.gt.s32.totalorder %v685, 0
        %v687 = vsel %vm686, %v685, 0
        %v688 = vshrl.u32 %v687, 5
        %v689 = vand.u32 %v687, 31
        %v690 = vsub.s32 32, %v689
        %v691 = vshrl.u32 683565275, %v690
        %v692 = vshll.u32 683565275, %v689
        %v693 = vshrl.u32 2475754826, %v690
        %v694 = vor.u32 %v692, %v693
        %v695 = vshll.u32 2475754826, %v689
        %v696 = vshrl.u32 2131351028, %v690
        %v697 = vor.u32 %v695, %v696
        %v698 = vshll.u32 2131351028, %v689
        %v699 = vshrl.u32 2102212464, %v690
        %v700 = vor.u32 %v698, %v699
        %v701 = vshll.u32 2102212464, %v689
        %v702 = vshrl.u32 920167782, %v690
        %v703 = vor.u32 %v701, %v702
        %v704 = vshll.u32 920167782, %v689
        %v705 = vshrl.u32 1326507024, %v690
        %v706 = vor.u32 %v704, %v705
        %vm707 = vcmp.lt.s32.totalorder %v688, 1
        %vm708 = vcmp.lt.s32.totalorder %v688, 2
        %vm709 = vcmp.lt.s32.totalorder %v688, 3
        %vm710 = vcmp.lt.s32.totalorder %v688, 4
        %v711 = vsel %vm707, %v691, %v694
        %v712 = vsel %vm710, %v700, 2102212464
        %v713 = vsel %vm709, %v697, %v712
        %v714 = vsel %vm708, %v711, %v713
        %v715 = vsel %vm707, %v694, %v697
        %v716 = vsel %vm710, %v703, 920167782
        %v717 = vsel %vm709, %v700, %v716
        %v718 = vsel %vm708, %v715, %v717
        %v719 = vsel %vm707, %v697, %v700
        %v720 = vsel %vm710, %v706, 1326507024
        %v721 = vsel %vm709, %v703, %v720
        %v722 = vsel %vm708, %v719, %v721
        %v723 = vshll.u32 %v683, 8
        %v724 = vmul.u32.u64.compose %v723, %v722
        %v725 = vextract.low.u32 %v724
        %v726 = vextract.high.u32 %v724
        %v727 = vmul.u32.u64.compose %v723, %v718
        %v728 = vextract.low.u32 %v727
        %v729 = vextract.high.u32 %v727
        %v730 = vmul.u32 %v723, %v714
        %v731 = vadd.s32 %v726, %v728
        %vm732 = vc.u32 %v726, %v728
        %v733 = vadd.s32 %v729, 1
        %v734 = vsel %vm732, %v733, %v729
        %v735 = vadd.s32 %v730, %v734
        %v736 = vadd.s32 %v735, 536870912
        %v737 = vshrl.u32 %v736, 30
        %v738 = vshll.u32 %v737, 30
        %v739 = vsub.s32 %v735, %v738
        %vm740 = vcmp.lt.s32.totalorder %v739, 0
        %v741 = vsub.s32 0, %v739
        %v742 = vsel %vm740, %v741, %v739
        %v743 = vclz %v742
        %v744 = vsub.s32 %v743, 2
        %vm745 = vcmp.gt.s32.totalorder 0, %v744
        %v746 = vsel %vm745, 0, %v744
        %v747 = vsub.s32 32, %v746
        %v748 = vshll.u32 %v739, %v746
        %v749 = vshrl.u32 %v731, %v747
        %v750 = vor.u32 %v748, %v749
        %v751 = vsub.s32 4294967266, %v746
        %v752 = vadd.s32 %v751, 127
        %v753 = vshll.u32 %v752, 23
        %v754 = vor.u32 4788187, %v753
        %v755 = vand.u32 2147483647, %v754
        %v757 = vcvt.s32.f32 %v750
        %v758 = vmul.f32 %v757, %v755
        %v759 = vxor.u32 %v758, 2147483648
        %v760 = vsel %vm677, %v759, %v758
        %v761 = vsub.s32 4, %v737
        %v762 = vsel %vm677, %v761, %v737
        %v763 = vsel %vm676, %v362, %v760
        %v764 = vsel %vm676, 0, %v762
        %v765 = vcosq.f32.pop %v763
        %v766 = vsinq.f32.pop %v763
        %vm767 = vweird.f32 %v362
        %v768 = vadd.s32 %v764, 3
        %v769 = vand.u32 %v768, 3
        %vm770 = vcmp.lt.s32.totalorder %v769, 2
        %vm771 = vcmp.eq.s32.totalorder %v769, 0
        %v772 = vxor.u32 %v766, 2147483648
        %v773 = vsel %vm771, %v765, %v772
        %vm774 = vcmp.eq.s32.totalorder %v769, 2
        %v775 = vxor.u32 %v765, 2147483648
        %v776 = vsel %vm774, %v775, %v766
        %v777 = vsel %vm770, %v773, %v776
        %v778 = vsel %vm767, nan, %v777
        %v779 = vld [vmem:[%s3] sm:$0xff]
        %v780 = vld [vmem:[%s3 + $0x8] sm:$0xff]
        %v781 = vld [vmem:[%s3 + $0x10] sm:$0xff]
        %v782 = vld [vmem:[%s3 + $0x18] sm:$0xff]
        %v783 = vld [vmem:[%s4] sm:$0xff]
        %v784 = vld [vmem:[%s4 + $0x8] sm:$0xff]
        %v785 = vld [vmem:[%s4 + $0x10] sm:$0xff]
        %v786 = vld [vmem:[%s4 + $0x18] sm:$0xff]
        %788 = vset.pattern.permute.xlu0 0
        %789 = vperm.xlu0 %788, %v783
        %v790 = vpop.permute.xlu0 %789
        %793 = vset.pattern.permute.xlu0 0
        %794 = vperm.xlu0 %793, %v784
        %v795 = vpop.permute.xlu0 %794
        %798 = vset.pattern.permute.xlu0 0
        %799 = vperm.xlu0 %798, %v785
        %v800 = vpop.permute.xlu0 %799
        %803 = vset.pattern.permute.xlu0 0
        %804 = vperm.xlu0 %803, %v786
        %v805 = vpop.permute.xlu0 %804
        %vm807 = vcmask 261120
        %v809 = vsel %vm807, %v779, 0
        %v812 = vsel %vm807, %v780, 0
        %v815 = vsel %vm807, %v781, 0
        %v818 = vsel %vm807, %v782, 0
        %820 = vmatprep.subr.mxu0 0.0
        %821 = vmatpush1.msra.mxu0 0.0
        %822 = vmatprep.subr.mxu0 0.0
        %823 = vmatpush1.msra.mxu0 0.0
        %824 = vmatprep.subr.mxu0 0.0
        %825 = vmatpush1.msra.mxu0 0.0
        %826 = vmatprep.subr.mxu0 0.0
        %827 = vmatpush1.msra.mxu0 0.0
        %828 = vmatprep.subr.mxu0 0.0
        %829 = vmatpush1.msra.mxu0 0.0
        %830 = vmatprep.subr.mxu0 0.0
        %831 = vmatpush1.msra.mxu0 0.0
        %832 = vmatprep.subr.mxu0 0.0
        %833 = vmatpush1.msra.mxu0 0.0
        %834 = vmatprep.subr.mxu0 0.0
        %835 = vmatpush1.msra.mxu0 0.0
        %836 = vmatprep.subr.mxu0 0.0
        %837 = vmatpush1.msra.mxu0 0.0
        %838 = vmatprep.subr.mxu0 0.0
        %839 = vmatpush1.msra.mxu0 0.0
        %840 = vmatprep.subr.mxu0 0.0
        %841 = vmatpush1.msra.mxu0 0.0
        %842 = vmatprep.subr.mxu0 0.0
        %843 = vmatpush1.msra.mxu0 0.0
        %844 = vmatprep.subr.mxu0 0.0
        %v845 = vand.u32 %v778, 4294901760
        %846 = vmatpush1.msra.mxu0 %v845
        %847 = vmatprep.subr.mxu0 0.0
        %v848 = vand.u32 %v674, 4294901760
        %849 = vmatpush1.msra.mxu0 %v848
        %850 = vmatprep.subr.mxu0 0.0
        %v851 = vand.u32 %v570, 4294901760
        %852 = vmatpush1.msra.mxu0 %v851
        %853 = vmatprep.subr.mxu0 0.0
        %v854 = vand.u32 %v466, 4294901760
        %855 = vmatpush1.msra.mxu0 %v854
        %856 = vmatprep.subr.mxu0 0.0
        %857 = vmatpush2.msra.mxu0 0.0
        %858 = vmatprep.subr.mxu0 0.0
        %859 = vmatpush2.msra.mxu0 0.0
        %860 = vmatprep.subr.mxu0 0.0
        %861 = vmatpush2.msra.mxu0 0.0
        %862 = vmatprep.subr.mxu0 0.0
        %863 = vmatpush2.msra.mxu0 0.0
        %864 = vmatprep.subr.mxu0 0.0
        %865 = vmatpush2.msra.mxu0 0.0
        %866 = vmatprep.subr.mxu0 0.0
        %867 = vmatpush2.msra.mxu0 0.0
        %868 = vmatprep.subr.mxu0 0.0
        %869 = vmatpush2.msra.mxu0 0.0
        %870 = vmatprep.subr.mxu0 0.0
        %871 = vmatpush2.msra.mxu0 0.0
        %872 = vmatprep.subr.mxu0 0.0
        %873 = vmatpush2.msra.mxu0 0.0
        %874 = vmatprep.subr.mxu0 0.0
        %875 = vmatpush2.msra.mxu0 0.0
        %876 = vmatprep.subr.mxu0 0.0
        %877 = vmatpush2.msra.mxu0 0.0
        %878 = vmatprep.subr.mxu0 0.0
        %879 = vmatpush2.msra.mxu0 0.0
        %880 = vmatprep.subr.mxu0 0.0
        %881 = vmatpush2.msra.mxu0 0.0
        %882 = vmatprep.subr.mxu0 0.0
        %883 = vmatpush2.msra.mxu0 0.0
        %884 = vmatprep.subr.mxu0 0.0
        %885 = vmatpush2.msra.mxu0 0.0
        %886 = vmatprep.subr.mxu0 0.0
        %887 = vmatpush2.msra.mxu0 0.0
        %888 = vmatprep.mubr.f32.mxu0 0.0
        %v889 = vand.u32 %v809, 4294901760
        %v890 = vsub.f32 %v809, %v889
        %v891 = vand.u32 %v890, 4294901760
        %v892 = vsub.f32 %v890, %v891
        %v893 = vand.u32 %v892, 4294901760
        %894 = vmatmul.mubr.f32.gmra.mxu0 %v893
        %v895 = vpop.f32.mrf.mxu0
        %v896 = vadd.f32 %v790, %v895
        %v897 = vpop.f32.mrf.mxu0
        %898 = vmatprep.mubr.f32.mxu0 0.0
        %v899 = vand.u32 %v812, 4294901760
        %v900 = vsub.f32 %v812, %v899
        %v901 = vand.u32 %v900, 4294901760
        %v902 = vsub.f32 %v900, %v901
        %v903 = vand.u32 %v902, 4294901760
        %904 = vmatmul.mubr.f32.gmra.mxu0 %v903
        %v905 = vpop.f32.mrf.mxu0
        %v906 = vadd.f32 %v795, %v905
        %v907 = vpop.f32.mrf.mxu0
        %908 = vmatprep.mubr.f32.mxu0 0.0
        %v909 = vand.u32 %v815, 4294901760
        %v910 = vsub.f32 %v815, %v909
        %v911 = vand.u32 %v910, 4294901760
        %v912 = vsub.f32 %v910, %v911
        %v913 = vand.u32 %v912, 4294901760
        %914 = vmatmul.mubr.f32.gmra.mxu0 %v913
        %v915 = vpop.f32.mrf.mxu0
        %v916 = vadd.f32 %v800, %v915
        %v917 = vpop.f32.mrf.mxu0
        %918 = vmatprep.mubr.f32.mxu0 0.0
        %v919 = vand.u32 %v818, 4294901760
        %v920 = vsub.f32 %v818, %v919
        %v921 = vand.u32 %v920, 4294901760
        %v922 = vsub.f32 %v920, %v921
        %v923 = vand.u32 %v922, 4294901760
        %924 = vmatmul.mubr.f32.gmra.mxu0 %v923
        %v925 = vpop.f32.mrf.mxu0
        %v926 = vadd.f32 %v805, %v925
        %v927 = vpop.f32.mrf.mxu0
        %928 = vdwg.mxu0
        %929 = vmatprep.subr.mxu0 0.0
        %930 = vmatpush1.msra.mxu0 0.0
        %931 = vmatprep.subr.mxu0 0.0
        %932 = vmatpush1.msra.mxu0 0.0
        %933 = vmatprep.subr.mxu0 0.0
        %934 = vmatpush1.msra.mxu0 0.0
        %935 = vmatprep.subr.mxu0 0.0
        %936 = vmatpush1.msra.mxu0 0.0
        %937 = vmatprep.subr.mxu0 0.0
        %938 = vmatpush1.msra.mxu0 0.0
        %939 = vmatprep.subr.mxu0 0.0
        %940 = vmatpush1.msra.mxu0 0.0
        %941 = vmatprep.subr.mxu0 0.0
        %942 = vmatpush1.msra.mxu0 0.0
        %943 = vmatprep.subr.mxu0 0.0
        %944 = vmatpush1.msra.mxu0 0.0
        %945 = vmatprep.subr.mxu0 0.0
        %946 = vmatpush1.msra.mxu0 0.0
        %947 = vmatprep.subr.mxu0 0.0
        %948 = vmatpush1.msra.mxu0 0.0
        %949 = vmatprep.subr.mxu0 0.0
        %950 = vmatpush1.msra.mxu0 0.0
        %951 = vmatprep.subr.mxu0 0.0
        %952 = vmatpush1.msra.mxu0 0.0
        %953 = vmatprep.subr.mxu0 0.0
        %v954 = vand.u32 %v778, 4294901760
        %v955 = vsub.f32 %v778, %v954
        %v956 = vand.u32 %v955, 4294901760
        %v957 = vsub.f32 %v955, %v956
        %v958 = vand.u32 %v957, 4294901760
        %959 = vmatpush1.msra.mxu0 %v958
        %960 = vmatprep.subr.mxu0 0.0
        %v961 = vand.u32 %v674, 4294901760
        %v962 = vsub.f32 %v674, %v961
        %v963 = vand.u32 %v962, 4294901760
        %v964 = vsub.f32 %v962, %v963
        %v965 = vand.u32 %v964, 4294901760
        %966 = vmatpush1.msra.mxu0 %v965
        %967 = vmatprep.subr.mxu0 0.0
        %v968 = vand.u32 %v570, 4294901760
        %v969 = vsub.f32 %v570, %v968
        %v970 = vand.u32 %v969, 4294901760
        %v971 = vsub.f32 %v969, %v970
        %v972 = vand.u32 %v971, 4294901760
        %973 = vmatpush1.msra.mxu0 %v972
        %974 = vmatprep.subr.mxu0 0.0
        %v975 = vand.u32 %v466, 4294901760
        %v976 = vsub.f32 %v466, %v975
        %v977 = vand.u32 %v976, 4294901760
        %v978 = vsub.f32 %v976, %v977
        %v979 = vand.u32 %v978, 4294901760
        %980 = vmatpush1.msra.mxu0 %v979
        %981 = vmatprep.subr.mxu0 0.0
        %982 = vmatpush2.msra.mxu0 0.0
        %983 = vmatprep.subr.mxu0 0.0
        %984 = vmatpush2.msra.mxu0 0.0
        %985 = vmatprep.subr.mxu0 0.0
        %986 = vmatpush2.msra.mxu0 0.0
        %987 = vmatprep.subr.mxu0 0.0
        %988 = vmatpush2.msra.mxu0 0.0
        %989 = vmatprep.subr.mxu0 0.0
        %990 = vmatpush2.msra.mxu0 0.0
        %991 = vmatprep.subr.mxu0 0.0
        %992 = vmatpush2.msra.mxu0 0.0
        %993 = vmatprep.subr.mxu0 0.0
        %994 = vmatpush2.msra.mxu0 0.0
        %995 = vmatprep.subr.mxu0 0.0
        %996 = vmatpush2.msra.mxu0 0.0
        %997 = vmatprep.subr.mxu0 0.0
        %998 = vmatpush2.msra.mxu0 0.0
        %999 = vmatprep.subr.mxu0 0.0
        %1000 = vmatpush2.msra.mxu0 0.0
        %1001 = vmatprep.subr.mxu0 0.0
        %1002 = vmatpush2.msra.mxu0 0.0
        %1003 = vmatprep.subr.mxu0 0.0
        %1004 = vmatpush2.msra.mxu0 0.0
        %1005 = vmatprep.subr.mxu0 0.0
        %1006 = vmatpush2.msra.mxu0 0.0
        %1007 = vmatprep.subr.mxu0 0.0
        %1008 = vmatpush2.msra.mxu0 0.0
        %1009 = vmatprep.subr.mxu0 0.0
        %1010 = vmatpush2.msra.mxu0 0.0
        %1011 = vmatprep.subr.mxu0 0.0
        %1012 = vmatpush2.msra.mxu0 0.0
        %1013 = vmatprep.mubr.f32.mxu0 0.0
        %v1014 = vand.u32 %v809, 4294901760
        %1015 = vmatmul.mubr.f32.gmra.mxu0 %v1014
        %v1016 = vpop.f32.mrf.mxu0
        %v1017 = vadd.f32 %v896, %v1016
        %v1018 = vpop.f32.mrf.mxu0
        %1019 = vmatprep.mubr.f32.mxu0 0.0
        %v1020 = vand.u32 %v812, 4294901760
        %1021 = vmatmul.mubr.f32.gmra.mxu0 %v1020
        %v1022 = vpop.f32.mrf.mxu0
        %v1023 = vadd.f32 %v906, %v1022
        %v1024 = vpop.f32.mrf.mxu0
        %1025 = vmatprep.mubr.f32.mxu0 0.0
        %v1026 = vand.u32 %v815, 4294901760
        %1027 = vmatmul.mubr.f32.gmra.mxu0 %v1026
        %v1028 = vpop.f32.mrf.mxu0
        %v1029 = vadd.f32 %v916, %v1028
        %v1030 = vpop.f32.mrf.mxu0
        %1031 = vmatprep.mubr.f32.mxu0 0.0
        %v1032 = vand.u32 %v818, 4294901760
        %1033 = vmatmul.mubr.f32.gmra.mxu0 %v1032
        %v1034 = vpop.f32.mrf.mxu0
        %v1035 = vadd.f32 %v926, %v1034
        %v1036 = vpop.f32.mrf.mxu0
        %1037 = vdwg.mxu0
        %1038 = vmatprep.subr.mxu0 0.0
        %1039 = vmatpush1.msra.mxu0 0.0
        %1040 = vmatprep.subr.mxu0 0.0
        %1041 = vmatpush1.msra.mxu0 0.0
        %1042 = vmatprep.subr.mxu0 0.0
        %1043 = vmatpush1.msra.mxu0 0.0
        %1044 = vmatprep.subr.mxu0 0.0
        %1045 = vmatpush1.msra.mxu0 0.0
        %1046 = vmatprep.subr.mxu0 0.0
        %1047 = vmatpush1.msra.mxu0 0.0
        %1048 = vmatprep.subr.mxu0 0.0
        %1049 = vmatpush1.msra.mxu0 0.0
        %1050 = vmatprep.subr.mxu0 0.0
        %1051 = vmatpush1.msra.mxu0 0.0
        %1052 = vmatprep.subr.mxu0 0.0
        %1053 = vmatpush1.msra.mxu0 0.0
        %1054 = vmatprep.subr.mxu0 0.0
        %1055 = vmatpush1.msra.mxu0 0.0
        %1056 = vmatprep.subr.mxu0 0.0
        %1057 = vmatpush1.msra.mxu0 0.0
        %1058 = vmatprep.subr.mxu0 0.0
        %1059 = vmatpush1.msra.mxu0 0.0
        %1060 = vmatprep.subr.mxu0 0.0
        %1061 = vmatpush1.msra.mxu0 0.0
        %1062 = vmatprep.subr.mxu0 0.0
        %v1063 = vand.u32 %v778, 4294901760
        %v1064 = vsub.f32 %v778, %v1063
        %1065 = vmatpush1.msra.mxu0 %v1064
        %1066 = vmatprep.subr.mxu0 0.0
        %v1067 = vand.u32 %v674, 4294901760
        %v1068 = vsub.f32 %v674, %v1067
        %1069 = vmatpush1.msra.mxu0 %v1068
        %1070 = vmatprep.subr.mxu0 0.0
        %v1071 = vand.u32 %v570, 4294901760
        %v1072 = vsub.f32 %v570, %v1071
        %1073 = vmatpush1.msra.mxu0 %v1072
        %1074 = vmatprep.subr.mxu0 0.0
        %v1075 = vand.u32 %v466, 4294901760
        %v1076 = vsub.f32 %v466, %v1075
        %1077 = vmatpush1.msra.mxu0 %v1076
        %1078 = vmatprep.subr.mxu0 0.0
        %1079 = vmatpush2.msra.mxu0 0.0
        %1080 = vmatprep.subr.mxu0 0.0
        %1081 = vmatpush2.msra.mxu0 0.0
        %1082 = vmatprep.subr.mxu0 0.0
        %1083 = vmatpush2.msra.mxu0 0.0
        %1084 = vmatprep.subr.mxu0 0.0
        %1085 = vmatpush2.msra.mxu0 0.0
        %1086 = vmatprep.subr.mxu0 0.0
        %1087 = vmatpush2.msra.mxu0 0.0
        %1088 = vmatprep.subr.mxu0 0.0
        %1089 = vmatpush2.msra.mxu0 0.0
        %1090 = vmatprep.subr.mxu0 0.0
        %1091 = vmatpush2.msra.mxu0 0.0
        %1092 = vmatprep.subr.mxu0 0.0
        %1093 = vmatpush2.msra.mxu0 0.0
        %1094 = vmatprep.subr.mxu0 0.0
        %1095 = vmatpush2.msra.mxu0 0.0
        %1096 = vmatprep.subr.mxu0 0.0
        %1097 = vmatpush2.msra.mxu0 0.0
        %1098 = vmatprep.subr.mxu0 0.0
        %1099 = vmatpush2.msra.mxu0 0.0
        %1100 = vmatprep.subr.mxu0 0.0
        %1101 = vmatpush2.msra.mxu0 0.0
        %1102 = vmatprep.subr.mxu0 0.0
        %1103 = vmatpush2.msra.mxu0 0.0
        %1104 = vmatprep.subr.mxu0 0.0
        %1105 = vmatpush2.msra.mxu0 0.0
        %1106 = vmatprep.subr.mxu0 0.0
        %1107 = vmatpush2.msra.mxu0 0.0
        %1108 = vmatprep.subr.mxu0 0.0
        %1109 = vmatpush2.msra.mxu0 0.0
        %1110 = vmatprep.mubr.f32.mxu0 0.0
        %v1111 = vand.u32 %v809, 4294901760
        %v1112 = vsub.f32 %v809, %v1111
        %1113 = vmatmul.mubr.f32.gmra.mxu0 %v1112
        %v1114 = vpop.f32.mrf.mxu0
        %v1115 = vadd.f32 %v1017, %v1114
        %v1116 = vpop.f32.mrf.mxu0
        %1117 = vmatprep.mubr.f32.mxu0 0.0
        %v1118 = vand.u32 %v812, 4294901760
        %v1119 = vsub.f32 %v812, %v1118
        %1120 = vmatmul.mubr.f32.gmra.mxu0 %v1119
        %v1121 = vpop.f32.mrf.mxu0
        %v1122 = vadd.f32 %v1023, %v1121
        %v1123 = vpop.f32.mrf.mxu0
        %1124 = vmatprep.mubr.f32.mxu0 0.0
        %v1125 = vand.u32 %v815, 4294901760
        %v1126 = vsub.f32 %v815, %v1125
        %1127 = vmatmul.mubr.f32.gmra.mxu0 %v1126
        %v1128 = vpop.f32.mrf.mxu0
        %v1129 = vadd.f32 %v1029, %v1128
        %v1130 = vpop.f32.mrf.mxu0
        %1131 = vmatprep.mubr.f32.mxu0 0.0
        %v1132 = vand.u32 %v818, 4294901760
        %v1133 = vsub.f32 %v818, %v1132
        %1134 = vmatmul.mubr.f32.gmra.mxu0 %v1133
        %v1135 = vpop.f32.mrf.mxu0
        %v1136 = vadd.f32 %v1035, %v1135
        %v1137 = vpop.f32.mrf.mxu0
        %1138 = vdwg.mxu0
        %1139 = vmatprep.subr.mxu0 0.0
        %1140 = vmatpush1.msra.mxu0 0.0
        %1141 = vmatprep.subr.mxu0 0.0
        %1142 = vmatpush1.msra.mxu0 0.0
        %1143 = vmatprep.subr.mxu0 0.0
        %1144 = vmatpush1.msra.mxu0 0.0
        %1145 = vmatprep.subr.mxu0 0.0
        %1146 = vmatpush1.msra.mxu0 0.0
        %1147 = vmatprep.subr.mxu0 0.0
        %1148 = vmatpush1.msra.mxu0 0.0
        %1149 = vmatprep.subr.mxu0 0.0
        %1150 = vmatpush1.msra.mxu0 0.0
        %1151 = vmatprep.subr.mxu0 0.0
        %1152 = vmatpush1.msra.mxu0 0.0
        %1153 = vmatprep.subr.mxu0 0.0
        %1154 = vmatpush1.msra.mxu0 0.0
        %1155 = vmatprep.subr.mxu0 0.0
        %1156 = vmatpush1.msra.mxu0 0.0
        %1157 = vmatprep.subr.mxu0 0.0
        %1158 = vmatpush1.msra.mxu0 0.0
        %1159 = vmatprep.subr.mxu0 0.0
        %1160 = vmatpush1.msra.mxu0 0.0
        %1161 = vmatprep.subr.mxu0 0.0
        %1162 = vmatpush1.msra.mxu0 0.0
        %1163 = vmatprep.subr.mxu0 0.0
        %v1164 = vand.u32 %v778, 4294901760
        %1165 = vmatpush1.msra.mxu0 %v1164
        %1166 = vmatprep.subr.mxu0 0.0
        %v1167 = vand.u32 %v674, 4294901760
        %1168 = vmatpush1.msra.mxu0 %v1167
        %1169 = vmatprep.subr.mxu0 0.0
        %v1170 = vand.u32 %v570, 4294901760
        %1171 = vmatpush1.msra.mxu0 %v1170
        %1172 = vmatprep.subr.mxu0 0.0
        %v1173 = vand.u32 %v466, 4294901760
        %1174 = vmatpush1.msra.mxu0 %v1173
        %1175 = vmatprep.subr.mxu0 0.0
        %1176 = vmatpush2.msra.mxu0 0.0
        %1177 = vmatprep.subr.mxu0 0.0
        %1178 = vmatpush2.msra.mxu0 0.0
        %1179 = vmatprep.subr.mxu0 0.0
        %1180 = vmatpush2.msra.mxu0 0.0
        %1181 = vmatprep.subr.mxu0 0.0
        %1182 = vmatpush2.msra.mxu0 0.0
        %1183 = vmatprep.subr.mxu0 0.0
        %1184 = vmatpush2.msra.mxu0 0.0
        %1185 = vmatprep.subr.mxu0 0.0
        %1186 = vmatpush2.msra.mxu0 0.0
        %1187 = vmatprep.subr.mxu0 0.0
        %1188 = vmatpush2.msra.mxu0 0.0
        %1189 = vmatprep.subr.mxu0 0.0
        %1190 = vmatpush2.msra.mxu0 0.0
        %1191 = vmatprep.subr.mxu0 0.0
        %1192 = vmatpush2.msra.mxu0 0.0
        %1193 = vmatprep.subr.mxu0 0.0
        %1194 = vmatpush2.msra.mxu0 0.0
        %1195 = vmatprep.subr.mxu0 0.0
        %1196 = vmatpush2.msra.mxu0 0.0
        %1197 = vmatprep.subr.mxu0 0.0
        %1198 = vmatpush2.msra.mxu0 0.0
        %1199 = vmatprep.subr.mxu0 0.0
        %1200 = vmatpush2.msra.mxu0 0.0
        %1201 = vmatprep.subr.mxu0 0.0
        %1202 = vmatpush2.msra.mxu0 0.0
        %1203 = vmatprep.subr.mxu0 0.0
        %1204 = vmatpush2.msra.mxu0 0.0
        %1205 = vmatprep.subr.mxu0 0.0
        %1206 = vmatpush2.msra.mxu0 0.0
        %1207 = vmatprep.mubr.f32.mxu0 0.0
        %v1208 = vand.u32 %v809, 4294901760
        %v1209 = vsub.f32 %v809, %v1208
        %v1210 = vand.u32 %v1209, 4294901760
        %1211 = vmatmul.mubr.f32.gmra.mxu0 %v1210
        %v1212 = vpop.f32.mrf.mxu0
        %v1213 = vadd.f32 %v1115, %v1212
        %v1214 = vpop.f32.mrf.mxu0
        %1215 = vmatprep.mubr.f32.mxu0 0.0
        %v1216 = vand.u32 %v812, 4294901760
        %v1217 = vsub.f32 %v812, %v1216
        %v1218 = vand.u32 %v1217, 4294901760
        %1219 = vmatmul.mubr.f32.gmra.mxu0 %v1218
        %v1220 = vpop.f32.mrf.mxu0
        %v1221 = vadd.f32 %v1122, %v1220
        %v1222 = vpop.f32.mrf.mxu0
        %1223 = vmatprep.mubr.f32.mxu0 0.0
        %v1224 = vand.u32 %v815, 4294901760
        %v1225 = vsub.f32 %v815, %v1224
        %v1226 = vand.u32 %v1225, 4294901760
        %1227 = vmatmul.mubr.f32.gmra.mxu0 %v1226
        %v1228 = vpop.f32.mrf.mxu0
        %v1229 = vadd.f32 %v1129, %v1228
        %v1230 = vpop.f32.mrf.mxu0
        %1231 = vmatprep.mubr.f32.mxu0 0.0
        %v1232 = vand.u32 %v818, 4294901760
        %v1233 = vsub.f32 %v818, %v1232
        %v1234 = vand.u32 %v1233, 4294901760
        %1235 = vmatmul.mubr.f32.gmra.mxu0 %v1234
        %v1236 = vpop.f32.mrf.mxu0
        %v1237 = vadd.f32 %v1136, %v1236
        %v1238 = vpop.f32.mrf.mxu0
        %1239 = vdwg.mxu0
        %1240 = vmatprep.subr.mxu0 0.0
        %1241 = vmatpush1.msra.mxu0 0.0
        %1242 = vmatprep.subr.mxu0 0.0
        %1243 = vmatpush1.msra.mxu0 0.0
        %1244 = vmatprep.subr.mxu0 0.0
        %1245 = vmatpush1.msra.mxu0 0.0
        %1246 = vmatprep.subr.mxu0 0.0
        %1247 = vmatpush1.msra.mxu0 0.0
        %1248 = vmatprep.subr.mxu0 0.0
        %1249 = vmatpush1.msra.mxu0 0.0
        %1250 = vmatprep.subr.mxu0 0.0
        %1251 = vmatpush1.msra.mxu0 0.0
        %1252 = vmatprep.subr.mxu0 0.0
        %1253 = vmatpush1.msra.mxu0 0.0
        %1254 = vmatprep.subr.mxu0 0.0
        %1255 = vmatpush1.msra.mxu0 0.0
        %1256 = vmatprep.subr.mxu0 0.0
        %1257 = vmatpush1.msra.mxu0 0.0
        %1258 = vmatprep.subr.mxu0 0.0
        %1259 = vmatpush1.msra.mxu0 0.0
        %1260 = vmatprep.subr.mxu0 0.0
        %1261 = vmatpush1.msra.mxu0 0.0
        %1262 = vmatprep.subr.mxu0 0.0
        %1263 = vmatpush1.msra.mxu0 0.0
        %1264 = vmatprep.subr.mxu0 0.0
        %v1265 = vand.u32 %v778, 4294901760
        %v1266 = vsub.f32 %v778, %v1265
        %v1267 = vand.u32 %v1266, 4294901760
        %1268 = vmatpush1.msra.mxu0 %v1267
        %1269 = vmatprep.subr.mxu0 0.0
        %v1270 = vand.u32 %v674, 4294901760
        %v1271 = vsub.f32 %v674, %v1270
        %v1272 = vand.u32 %v1271, 4294901760
        %1273 = vmatpush1.msra.mxu0 %v1272
        %1274 = vmatprep.subr.mxu0 0.0
        %v1275 = vand.u32 %v570, 4294901760
        %v1276 = vsub.f32 %v570, %v1275
        %v1277 = vand.u32 %v1276, 4294901760
        %1278 = vmatpush1.msra.mxu0 %v1277
        %1279 = vmatprep.subr.mxu0 0.0
        %v1280 = vand.u32 %v466, 4294901760
        %v1281 = vsub.f32 %v466, %v1280
        %v1282 = vand.u32 %v1281, 4294901760
        %1283 = vmatpush1.msra.mxu0 %v1282
        %1284 = vmatprep.subr.mxu0 0.0
        %1285 = vmatpush2.msra.mxu0 0.0
        %1286 = vmatprep.subr.mxu0 0.0
        %1287 = vmatpush2.msra.mxu0 0.0
        %1288 = vmatprep.subr.mxu0 0.0
        %1289 = vmatpush2.msra.mxu0 0.0
        %1290 = vmatprep.subr.mxu0 0.0
        %1291 = vmatpush2.msra.mxu0 0.0
        %1292 = vmatprep.subr.mxu0 0.0
        %1293 = vmatpush2.msra.mxu0 0.0
        %1294 = vmatprep.subr.mxu0 0.0
        %1295 = vmatpush2.msra.mxu0 0.0
        %1296 = vmatprep.subr.mxu0 0.0
        %1297 = vmatpush2.msra.mxu0 0.0
        %1298 = vmatprep.subr.mxu0 0.0
        %1299 = vmatpush2.msra.mxu0 0.0
        %1300 = vmatprep.subr.mxu0 0.0
        %1301 = vmatpush2.msra.mxu0 0.0
        %1302 = vmatprep.subr.mxu0 0.0
        %1303 = vmatpush2.msra.mxu0 0.0
        %1304 = vmatprep.subr.mxu0 0.0
        %1305 = vmatpush2.msra.mxu0 0.0
        %1306 = vmatprep.subr.mxu0 0.0
        %1307 = vmatpush2.msra.mxu0 0.0
        %1308 = vmatprep.subr.mxu0 0.0
        %1309 = vmatpush2.msra.mxu0 0.0
        %1310 = vmatprep.subr.mxu0 0.0
        %1311 = vmatpush2.msra.mxu0 0.0
        %1312 = vmatprep.subr.mxu0 0.0
        %1313 = vmatpush2.msra.mxu0 0.0
        %1314 = vmatprep.subr.mxu0 0.0
        %1315 = vmatpush2.msra.mxu0 0.0
        %1316 = vmatprep.mubr.f32.mxu0 0.0
        %v1317 = vand.u32 %v809, 4294901760
        %1318 = vmatmul.mubr.f32.gmra.mxu0 %v1317
        %v1319 = vpop.f32.mrf.mxu0
        %v1320 = vadd.f32 %v1213, %v1319
        %v1321 = vpop.f32.mrf.mxu0
        %1322 = vmatprep.mubr.f32.mxu0 0.0
        %v1323 = vand.u32 %v812, 4294901760
        %1324 = vmatmul.mubr.f32.gmra.mxu0 %v1323
        %v1325 = vpop.f32.mrf.mxu0
        %v1326 = vadd.f32 %v1221, %v1325
        %v1327 = vpop.f32.mrf.mxu0
        %1328 = vmatprep.mubr.f32.mxu0 0.0
        %v1329 = vand.u32 %v815, 4294901760
        %1330 = vmatmul.mubr.f32.gmra.mxu0 %v1329
        %v1331 = vpop.f32.mrf.mxu0
        %v1332 = vadd.f32 %v1229, %v1331
        %v1333 = vpop.f32.mrf.mxu0
        %1334 = vmatprep.mubr.f32.mxu0 0.0
        %v1335 = vand.u32 %v818, 4294901760
        %1336 = vmatmul.mubr.f32.gmra.mxu0 %v1335
        %v1337 = vpop.f32.mrf.mxu0
        %v1338 = vadd.f32 %v1237, %v1337
        %v1339 = vpop.f32.mrf.mxu0
        %1340 = vdwg.mxu0
        %1341 = vmatprep.subr.mxu0 0.0
        %1342 = vmatpush1.msra.mxu0 0.0
        %1343 = vmatprep.subr.mxu0 0.0
        %1344 = vmatpush1.msra.mxu0 0.0
        %1345 = vmatprep.subr.mxu0 0.0
        %1346 = vmatpush1.msra.mxu0 0.0
        %1347 = vmatprep.subr.mxu0 0.0
        %1348 = vmatpush1.msra.mxu0 0.0
        %1349 = vmatprep.subr.mxu0 0.0
        %1350 = vmatpush1.msra.mxu0 0.0
        %1351 = vmatprep.subr.mxu0 0.0
        %1352 = vmatpush1.msra.mxu0 0.0
        %1353 = vmatprep.subr.mxu0 0.0
        %1354 = vmatpush1.msra.mxu0 0.0
        %1355 = vmatprep.subr.mxu0 0.0
        %1356 = vmatpush1.msra.mxu0 0.0
        %1357 = vmatprep.subr.mxu0 0.0
        %1358 = vmatpush1.msra.mxu0 0.0
        %1359 = vmatprep.subr.mxu0 0.0
        %1360 = vmatpush1.msra.mxu0 0.0
        %1361 = vmatprep.subr.mxu0 0.0
        %1362 = vmatpush1.msra.mxu0 0.0
        %1363 = vmatprep.subr.mxu0 0.0
        %1364 = vmatpush1.msra.mxu0 0.0
        %1365 = vmatprep.subr.mxu0 0.0
        %v1366 = vand.u32 %v778, 4294901760
        %1367 = vmatpush1.msra.mxu0 %v1366
        %1368 = vmatprep.subr.mxu0 0.0
        %v1369 = vand.u32 %v674, 4294901760
        %1370 = vmatpush1.msra.mxu0 %v1369
        %1371 = vmatprep.subr.mxu0 0.0
        %v1372 = vand.u32 %v570, 4294901760
        %1373 = vmatpush1.msra.mxu0 %v1372
        %1374 = vmatprep.subr.mxu0 0.0
        %v1375 = vand.u32 %v466, 4294901760
        %1376 = vmatpush1.msra.mxu0 %v1375
        %1377 = vmatprep.subr.mxu0 0.0
        %1378 = vmatpush2.msra.mxu0 0.0
        %1379 = vmatprep.subr.mxu0 0.0
        %1380 = vmatpush2.msra.mxu0 0.0
        %1381 = vmatprep.subr.mxu0 0.0
        %1382 = vmatpush2.msra.mxu0 0.0
        %1383 = vmatprep.subr.mxu0 0.0
        %1384 = vmatpush2.msra.mxu0 0.0
        %1385 = vmatprep.subr.mxu0 0.0
        %1386 = vmatpush2.msra.mxu0 0.0
        %1387 = vmatprep.subr.mxu0 0.0
        %1388 = vmatpush2.msra.mxu0 0.0
        %1389 = vmatprep.subr.mxu0 0.0
        %1390 = vmatpush2.msra.mxu0 0.0
        %1391 = vmatprep.subr.mxu0 0.0
        %1392 = vmatpush2.msra.mxu0 0.0
        %1393 = vmatprep.subr.mxu0 0.0
        %1394 = vmatpush2.msra.mxu0 0.0
        %1395 = vmatprep.subr.mxu0 0.0
        %1396 = vmatpush2.msra.mxu0 0.0
        %1397 = vmatprep.subr.mxu0 0.0
        %1398 = vmatpush2.msra.mxu0 0.0
        %1399 = vmatprep.subr.mxu0 0.0
        %1400 = vmatpush2.msra.mxu0 0.0
        %1401 = vmatprep.subr.mxu0 0.0
        %1402 = vmatpush2.msra.mxu0 0.0
        %1403 = vmatprep.subr.mxu0 0.0
        %1404 = vmatpush2.msra.mxu0 0.0
        %1405 = vmatprep.subr.mxu0 0.0
        %1406 = vmatpush2.msra.mxu0 0.0
        %1407 = vmatprep.subr.mxu0 0.0
        %1408 = vmatpush2.msra.mxu0 0.0
        %1409 = vmatprep.mubr.f32.mxu0 0.0
        %v1410 = vand.u32 %v809, 4294901760
        %1411 = vmatmul.mubr.f32.gmra.mxu0 %v1410
        %v1412 = vpop.f32.mrf.mxu0
        %v1413 = vadd.f32 %v1320, %v1412
        %v1414 = vpop.f32.mrf.mxu0
        %1415 = vmatprep.mubr.f32.mxu0 0.0
        %v1416 = vand.u32 %v812, 4294901760
        %1417 = vmatmul.mubr.f32.gmra.mxu0 %v1416
        %v1418 = vpop.f32.mrf.mxu0
        %v1419 = vadd.f32 %v1326, %v1418
        %v1420 = vpop.f32.mrf.mxu0
        %1421 = vmatprep.mubr.f32.mxu0 0.0
        %v1422 = vand.u32 %v815, 4294901760
        %1423 = vmatmul.mubr.f32.gmra.mxu0 %v1422
        %v1424 = vpop.f32.mrf.mxu0
        %v1425 = vadd.f32 %v1332, %v1424
        %v1426 = vpop.f32.mrf.mxu0
        %1427 = vmatprep.mubr.f32.mxu0 0.0
        %v1428 = vand.u32 %v818, 4294901760
        %1429 = vmatmul.mubr.f32.gmra.mxu0 %v1428
        %v1430 = vpop.f32.mrf.mxu0
        %v1431 = vadd.f32 %v1338, %v1430
        %v1432 = vpop.f32.mrf.mxu0
        %1433 = vdwg.mxu0
        %v1434 = vand.u32 2147483647, %v1413
        %vm1435 = vcmp.le.f32.partialorder %v1434, 0.7853982
        %vm1436 = vcmp.lt.s32.totalorder %v1413, 0
        %v1437 = vand.u32 %v1413, 2139095040
        %v1438 = vshrl.u32 %v1437, 23
        %v1439 = vsub.s32 %v1438, 127
        %v1440 = vand.u32 2147483647, %v1413
        %v1441 = vand.u32 %v1440, 8388607
        %v1442 = vor.u32 %v1441, 8388608
        %v1443 = vsub.s32 0, %v1442
        %v1444 = vadd.s32 %v1439, 1
        %vm1445 = vcmp.gt.s32.totalorder %v1444, 0
        %v1446 = vsel %vm1445, %v1444, 0
        %v1447 = vshrl.u32 %v1446, 5
        %v1448 = vand.u32 %v1446, 31
        %v1449 = vsub.s32 32, %v1448
        %v1450 = vshrl.u32 683565275, %v1449
        %v1451 = vshll.u32 683565275, %v1448
        %v1452 = vshrl.u32 2475754826, %v1449
        %v1453 = vor.u32 %v1451, %v1452
        %v1454 = vshll.u32 2475754826, %v1448
        %v1455 = vshrl.u32 2131351028, %v1449
        %v1456 = vor.u32 %v1454, %v1455
        %v1457 = vshll.u32 2131351028, %v1448
        %v1458 = vshrl.u32 2102212464, %v1449
        %v1459 = vor.u32 %v1457, %v1458
        %v1460 = vshll.u32 2102212464, %v1448
        %v1461 = vshrl.u32 920167782, %v1449
        %v1462 = vor.u32 %v1460, %v1461
        %v1463 = vshll.u32 920167782, %v1448
        %v1464 = vshrl.u32 1326507024, %v1449
        %v1465 = vor.u32 %v1463, %v1464
        %vm1466 = vcmp.lt.s32.totalorder %v1447, 1
        %vm1467 = vcmp.lt.s32.totalorder %v1447, 2
        %vm1468 = vcmp.lt.s32.totalorder %v1447, 3
        %vm1469 = vcmp.lt.s32.totalorder %v1447, 4
        %v1470 = vsel %vm1466, %v1450, %v1453
        %v1471 = vsel %vm1469, %v1459, 2102212464
        %v1472 = vsel %vm1468, %v1456, %v1471
        %v1473 = vsel %vm1467, %v1470, %v1472
        %v1474 = vsel %vm1466, %v1453, %v1456
        %v1475 = vsel %vm1469, %v1462, 920167782
        %v1476 = vsel %vm1468, %v1459, %v1475
        %v1477 = vsel %vm1467, %v1474, %v1476
        %v1478 = vsel %vm1466, %v1456, %v1459
        %v1479 = vsel %vm1469, %v1465, 1326507024
        %v1480 = vsel %vm1468, %v1462, %v1479
        %v1481 = vsel %vm1467, %v1478, %v1480
        %v1482 = vshll.u32 %v1442, 8
        %v1483 = vmul.u32.u64.compose %v1482, %v1481
        %v1484 = vextract.low.u32 %v1483
        %v1485 = vextract.high.u32 %v1483
        %v1486 = vmul.u32.u64.compose %v1482, %v1477
        %v1487 = vextract.low.u32 %v1486
        %v1488 = vextract.high.u32 %v1486
        %v1489 = vmul.u32 %v1482, %v1473
        %v1490 = vadd.s32 %v1485, %v1487
        %vm1491 = vc.u32 %v1485, %v1487
        %v1492 = vadd.s32 %v1488, 1
        %v1493 = vsel %vm1491, %v1492, %v1488
        %v1494 = vadd.s32 %v1489, %v1493
        %v1495 = vadd.s32 %v1494, 536870912
        %v1496 = vshrl.u32 %v1495, 30
        %v1497 = vshll.u32 %v1496, 30
        %v1498 = vsub.s32 %v1494, %v1497
        %vm1499 = vcmp.lt.s32.totalorder %v1498, 0
        %v1500 = vsub.s32 0, %v1498
        %v1501 = vsel %vm1499, %v1500, %v1498
        %v1502 = vclz %v1501
        %v1503 = vsub.s32 %v1502, 2
        %vm1504 = vcmp.gt.s32.totalorder 0, %v1503
        %v1505 = vsel %vm1504, 0, %v1503
        %v1506 = vsub.s32 32, %v1505
        %v1507 = vshll.u32 %v1498, %v1505
        %v1508 = vshrl.u32 %v1490, %v1506
        %v1509 = vor.u32 %v1507, %v1508
        %v1510 = vsub.s32 4294967266, %v1505
        %v1511 = vadd.s32 %v1510, 127
        %v1512 = vshll.u32 %v1511, 23
        %v1513 = vor.u32 4788187, %v1512
        %v1514 = vand.u32 2147483647, %v1513
        %v1516 = vcvt.s32.f32 %v1509
        %v1517 = vmul.f32 %v1516, %v1514
        %v1518 = vxor.u32 %v1517, 2147483648
        %v1519 = vsel %vm1436, %v1518, %v1517
        %v1520 = vsub.s32 4, %v1496
        %v1521 = vsel %vm1436, %v1520, %v1496
        %v1522 = vsel %vm1435, %v1413, %v1519
        %v1523 = vsel %vm1435, 0, %v1521
        %v1524 = vcosq.f32.pop %v1522
        %v1525 = vsinq.f32.pop %v1522
        %vm1526 = vweird.f32 %v1413
        %v1527 = vadd.s32 %v1523, 3
        %v1528 = vand.u32 %v1527, 3
        %vm1529 = vcmp.lt.s32.totalorder %v1528, 2
        %vm1530 = vcmp.eq.s32.totalorder %v1528, 0
        %v1531 = vxor.u32 %v1525, 2147483648
        %v1532 = vsel %vm1530, %v1524, %v1531
        %vm1533 = vcmp.eq.s32.totalorder %v1528, 2
        %v1534 = vxor.u32 %v1524, 2147483648
        %v1535 = vsel %vm1533, %v1534, %v1525
        %v1536 = vsel %vm1529, %v1532, %v1535
        %v1537 = vsel %vm1526, nan, %v1536
        %v1538 = vand.u32 2147483647, %v1419
        %vm1539 = vcmp.le.f32.partialorder %v1538, 0.7853982
        %vm1540 = vcmp.lt.s32.totalorder %v1419, 0
        %v1541 = vand.u32 %v1419, 2139095040
        %v1542 = vshrl.u32 %v1541, 23
        %v1543 = vsub.s32 %v1542, 127
        %v1544 = vand.u32 2147483647, %v1419
        %v1545 = vand.u32 %v1544, 8388607
        %v1546 = vor.u32 %v1545, 8388608
        %v1547 = vsub.s32 0, %v1546
        %v1548 = vadd.s32 %v1543, 1
        %vm1549 = vcmp.gt.s32.totalorder %v1548, 0
        %v1550 = vsel %vm1549, %v1548, 0
        %v1551 = vshrl.u32 %v1550, 5
        %v1552 = vand.u32 %v1550, 31
        %v1553 = vsub.s32 32, %v1552
        %v1554 = vshrl.u32 683565275, %v1553
        %v1555 = vshll.u32 683565275, %v1552
        %v1556 = vshrl.u32 2475754826, %v1553
        %v1557 = vor.u32 %v1555, %v1556
        %v1558 = vshll.u32 2475754826, %v1552
        %v1559 = vshrl.u32 2131351028, %v1553
        %v1560 = vor.u32 %v1558, %v1559
        %v1561 = vshll.u32 2131351028, %v1552
        %v1562 = vshrl.u32 2102212464, %v1553
        %v1563 = vor.u32 %v1561, %v1562
        %v1564 = vshll.u32 2102212464, %v1552
        %v1565 = vshrl.u32 920167782, %v1553
        %v1566 = vor.u32 %v1564, %v1565
        %v1567 = vshll.u32 920167782, %v1552
        %v1568 = vshrl.u32 1326507024, %v1553
        %v1569 = vor.u32 %v1567, %v1568
        %vm1570 = vcmp.lt.s32.totalorder %v1551, 1
        %vm1571 = vcmp.lt.s32.totalorder %v1551, 2
        %vm1572 = vcmp.lt.s32.totalorder %v1551, 3
        %vm1573 = vcmp.lt.s32.totalorder %v1551, 4
        %v1574 = vsel %vm1570, %v1554, %v1557
        %v1575 = vsel %vm1573, %v1563, 2102212464
        %v1576 = vsel %vm1572, %v1560, %v1575
        %v1577 = vsel %vm1571, %v1574, %v1576
        %v1578 = vsel %vm1570, %v1557, %v1560
        %v1579 = vsel %vm1573, %v1566, 920167782
        %v1580 = vsel %vm1572, %v1563, %v1579
        %v1581 = vsel %vm1571, %v1578, %v1580
        %v1582 = vsel %vm1570, %v1560, %v1563
        %v1583 = vsel %vm1573, %v1569, 1326507024
        %v1584 = vsel %vm1572, %v1566, %v1583
        %v1585 = vsel %vm1571, %v1582, %v1584
        %v1586 = vshll.u32 %v1546, 8
        %v1587 = vmul.u32.u64.compose %v1586, %v1585
        %v1588 = vextract.low.u32 %v1587
        %v1589 = vextract.high.u32 %v1587
        %v1590 = vmul.u32.u64.compose %v1586, %v1581
        %v1591 = vextract.low.u32 %v1590
        %v1592 = vextract.high.u32 %v1590
        %v1593 = vmul.u32 %v1586, %v1577
        %v1594 = vadd.s32 %v1589, %v1591
        %vm1595 = vc.u32 %v1589, %v1591
        %v1596 = vadd.s32 %v1592, 1
        %v1597 = vsel %vm1595, %v1596, %v1592
        %v1598 = vadd.s32 %v1593, %v1597
        %v1599 = vadd.s32 %v1598, 536870912
        %v1600 = vshrl.u32 %v1599, 30
        %v1601 = vshll.u32 %v1600, 30
        %v1602 = vsub.s32 %v1598, %v1601
        %vm1603 = vcmp.lt.s32.totalorder %v1602, 0
        %v1604 = vsub.s32 0, %v1602
        %v1605 = vsel %vm1603, %v1604, %v1602
        %v1606 = vclz %v1605
        %v1607 = vsub.s32 %v1606, 2
        %vm1608 = vcmp.gt.s32.totalorder 0, %v1607
        %v1609 = vsel %vm1608, 0, %v1607
        %v1610 = vsub.s32 32, %v1609
        %v1611 = vshll.u32 %v1602, %v1609
        %v1612 = vshrl.u32 %v1594, %v1610
        %v1613 = vor.u32 %v1611, %v1612
        %v1614 = vsub.s32 4294967266, %v1609
        %v1615 = vadd.s32 %v1614, 127
        %v1616 = vshll.u32 %v1615, 23
        %v1617 = vor.u32 4788187, %v1616
        %v1618 = vand.u32 2147483647, %v1617
        %v1620 = vcvt.s32.f32 %v1613
        %v1621 = vmul.f32 %v1620, %v1618
        %v1622 = vxor.u32 %v1621, 2147483648
        %v1623 = vsel %vm1540, %v1622, %v1621
        %v1624 = vsub.s32 4, %v1600
        %v1625 = vsel %vm1540, %v1624, %v1600
        %v1626 = vsel %vm1539, %v1419, %v1623
        %v1627 = vsel %vm1539, 0, %v1625
        %v1628 = vcosq.f32.pop %v1626
        %v1629 = vsinq.f32.pop %v1626
        %vm1630 = vweird.f32 %v1419
        %v1631 = vadd.s32 %v1627, 3
        %v1632 = vand.u32 %v1631, 3
        %vm1633 = vcmp.lt.s32.totalorder %v1632, 2
        %vm1634 = vcmp.eq.s32.totalorder %v1632, 0
        %v1635 = vxor.u32 %v1629, 2147483648
        %v1636 = vsel %vm1634, %v1628, %v1635
        %vm1637 = vcmp.eq.s32.totalorder %v1632, 2
        %v1638 = vxor.u32 %v1628, 2147483648
        %v1639 = vsel %vm1637, %v1638, %v1629
        %v1640 = vsel %vm1633, %v1636, %v1639
        %v1641 = vsel %vm1630, nan, %v1640
        %v1642 = vand.u32 2147483647, %v1425
        %vm1643 = vcmp.le.f32.partialorder %v1642, 0.7853982
        %vm1644 = vcmp.lt.s32.totalorder %v1425, 0
        %v1645 = vand.u32 %v1425, 2139095040
        %v1646 = vshrl.u32 %v1645, 23
        %v1647 = vsub.s32 %v1646, 127
        %v1648 = vand.u32 2147483647, %v1425
        %v1649 = vand.u32 %v1648, 8388607
        %v1650 = vor.u32 %v1649, 8388608
        %v1651 = vsub.s32 0, %v1650
        %v1652 = vadd.s32 %v1647, 1
        %vm1653 = vcmp.gt.s32.totalorder %v1652, 0
        %v1654 = vsel %vm1653, %v1652, 0
        %v1655 = vshrl.u32 %v1654, 5
        %v1656 = vand.u32 %v1654, 31
        %v1657 = vsub.s32 32, %v1656
        %v1658 = vshrl.u32 683565275, %v1657
        %v1659 = vshll.u32 683565275, %v1656
        %v1660 = vshrl.u32 2475754826, %v1657
        %v1661 = vor.u32 %v1659, %v1660
        %v1662 = vshll.u32 2475754826, %v1656
        %v1663 = vshrl.u32 2131351028, %v1657
        %v1664 = vor.u32 %v1662, %v1663
        %v1665 = vshll.u32 2131351028, %v1656
        %v1666 = vshrl.u32 2102212464, %v1657
        %v1667 = vor.u32 %v1665, %v1666
        %v1668 = vshll.u32 2102212464, %v1656
        %v1669 = vshrl.u32 920167782, %v1657
        %v1670 = vor.u32 %v1668, %v1669
        %v1671 = vshll.u32 920167782, %v1656
        %v1672 = vshrl.u32 1326507024, %v1657
        %v1673 = vor.u32 %v1671, %v1672
        %vm1674 = vcmp.lt.s32.totalorder %v1655, 1
        %vm1675 = vcmp.lt.s32.totalorder %v1655, 2
        %vm1676 = vcmp.lt.s32.totalorder %v1655, 3
        %vm1677 = vcmp.lt.s32.totalorder %v1655, 4
        %v1678 = vsel %vm1674, %v1658, %v1661
        %v1679 = vsel %vm1677, %v1667, 2102212464
        %v1680 = vsel %vm1676, %v1664, %v1679
        %v1681 = vsel %vm1675, %v1678, %v1680
        %v1682 = vsel %vm1674, %v1661, %v1664
        %v1683 = vsel %vm1677, %v1670, 920167782
        %v1684 = vsel %vm1676, %v1667, %v1683
        %v1685 = vsel %vm1675, %v1682, %v1684
        %v1686 = vsel %vm1674, %v1664, %v1667
        %v1687 = vsel %vm1677, %v1673, 1326507024
        %v1688 = vsel %vm1676, %v1670, %v1687
        %v1689 = vsel %vm1675, %v1686, %v1688
        %v1690 = vshll.u32 %v1650, 8
        %v1691 = vmul.u32.u64.compose %v1690, %v1689
        %v1692 = vextract.low.u32 %v1691
        %v1693 = vextract.high.u32 %v1691
        %v1694 = vmul.u32.u64.compose %v1690, %v1685
        %v1695 = vextract.low.u32 %v1694
        %v1696 = vextract.high.u32 %v1694
        %v1697 = vmul.u32 %v1690, %v1681
        %v1698 = vadd.s32 %v1693, %v1695
        %vm1699 = vc.u32 %v1693, %v1695
        %v1700 = vadd.s32 %v1696, 1
        %v1701 = vsel %vm1699, %v1700, %v1696
        %v1702 = vadd.s32 %v1697, %v1701
        %v1703 = vadd.s32 %v1702, 536870912
        %v1704 = vshrl.u32 %v1703, 30
        %v1705 = vshll.u32 %v1704, 30
        %v1706 = vsub.s32 %v1702, %v1705
        %vm1707 = vcmp.lt.s32.totalorder %v1706, 0
        %v1708 = vsub.s32 0, %v1706
        %v1709 = vsel %vm1707, %v1708, %v1706
        %v1710 = vclz %v1709
        %v1711 = vsub.s32 %v1710, 2
        %vm1712 = vcmp.gt.s32.totalorder 0, %v1711
        %v1713 = vsel %vm1712, 0, %v1711
        %v1714 = vsub.s32 32, %v1713
        %v1715 = vshll.u32 %v1706, %v1713
        %v1716 = vshrl.u32 %v1698, %v1714
        %v1717 = vor.u32 %v1715, %v1716
        %v1718 = vsub.s32 4294967266, %v1713
        %v1719 = vadd.s32 %v1718, 127
        %v1720 = vshll.u32 %v1719, 23
        %v1721 = vor.u32 4788187, %v1720
        %v1722 = vand.u32 2147483647, %v1721
        %v1724 = vcvt.s32.f32 %v1717
        %v1725 = vmul.f32 %v1724, %v1722
        %v1726 = vxor.u32 %v1725, 2147483648
        %v1727 = vsel %vm1644, %v1726, %v1725
        %v1728 = vsub.s32 4, %v1704
        %v1729 = vsel %vm1644, %v1728, %v1704
        %v1730 = vsel %vm1643, %v1425, %v1727
        %v1731 = vsel %vm1643, 0, %v1729
        %v1732 = vcosq.f32.pop %v1730
        %v1733 = vsinq.f32.pop %v1730
        %vm1734 = vweird.f32 %v1425
        %v1735 = vadd.s32 %v1731, 3
        %v1736 = vand.u32 %v1735, 3
        %vm1737 = vcmp.lt.s32.totalorder %v1736, 2
        %vm1738 = vcmp.eq.s32.totalorder %v1736, 0
        %v1739 = vxor.u32 %v1733, 2147483648
        %v1740 = vsel %vm1738, %v1732, %v1739
        %vm1741 = vcmp.eq.s32.totalorder %v1736, 2
        %v1742 = vxor.u32 %v1732, 2147483648
        %v1743 = vsel %vm1741, %v1742, %v1733
        %v1744 = vsel %vm1737, %v1740, %v1743
        %v1745 = vsel %vm1734, nan, %v1744
        %v1746 = vand.u32 2147483647, %v1431
        %vm1747 = vcmp.le.f32.partialorder %v1746, 0.7853982
        %vm1748 = vcmp.lt.s32.totalorder %v1431, 0
        %v1749 = vand.u32 %v1431, 2139095040
        %v1750 = vshrl.u32 %v1749, 23
        %v1751 = vsub.s32 %v1750, 127
        %v1752 = vand.u32 2147483647, %v1431
        %v1753 = vand.u32 %v1752, 8388607
        %v1754 = vor.u32 %v1753, 8388608
        %v1755 = vsub.s32 0, %v1754
        %v1756 = vadd.s32 %v1751, 1
        %vm1757 = vcmp.gt.s32.totalorder %v1756, 0
        %v1758 = vsel %vm1757, %v1756, 0
        %v1759 = vshrl.u32 %v1758, 5
        %v1760 = vand.u32 %v1758, 31
        %v1761 = vsub.s32 32, %v1760
        %v1762 = vshrl.u32 683565275, %v1761
        %v1763 = vshll.u32 683565275, %v1760
        %v1764 = vshrl.u32 2475754826, %v1761
        %v1765 = vor.u32 %v1763, %v1764
        %v1766 = vshll.u32 2475754826, %v1760
        %v1767 = vshrl.u32 2131351028, %v1761
        %v1768 = vor.u32 %v1766, %v1767
        %v1769 = vshll.u32 2131351028, %v1760
        %v1770 = vshrl.u32 2102212464, %v1761
        %v1771 = vor.u32 %v1769, %v1770
        %v1772 = vshll.u32 2102212464, %v1760
        %v1773 = vshrl.u32 920167782, %v1761
        %v1774 = vor.u32 %v1772, %v1773
        %v1775 = vshll.u32 920167782, %v1760
        %v1776 = vshrl.u32 1326507024, %v1761
        %v1777 = vor.u32 %v1775, %v1776
        %vm1778 = vcmp.lt.s32.totalorder %v1759, 1
        %vm1779 = vcmp.lt.s32.totalorder %v1759, 2
        %vm1780 = vcmp.lt.s32.totalorder %v1759, 3
        %vm1781 = vcmp.lt.s32.totalorder %v1759, 4
        %v1782 = vsel %vm1778, %v1762, %v1765
        %v1783 = vsel %vm1781, %v1771, 2102212464
        %v1784 = vsel %vm1780, %v1768, %v1783
        %v1785 = vsel %vm1779, %v1782, %v1784
        %v1786 = vsel %vm1778, %v1765, %v1768
        %v1787 = vsel %vm1781, %v1774, 920167782
        %v1788 = vsel %vm1780, %v1771, %v1787
        %v1789 = vsel %vm1779, %v1786, %v1788
        %v1790 = vsel %vm1778, %v1768, %v1771
        %v1791 = vsel %vm1781, %v1777, 1326507024
        %v1792 = vsel %vm1780, %v1774, %v1791
        %v1793 = vsel %vm1779, %v1790, %v1792
        %v1794 = vshll.u32 %v1754, 8
        %v1795 = vmul.u32.u64.compose %v1794, %v1793
        %v1796 = vextract.low.u32 %v1795
        %v1797 = vextract.high.u32 %v1795
        %v1798 = vmul.u32.u64.compose %v1794, %v1789
        %v1799 = vextract.low.u32 %v1798
        %v1800 = vextract.high.u32 %v1798
        %v1801 = vmul.u32 %v1794, %v1785
        %v1802 = vadd.s32 %v1797, %v1799
        %vm1803 = vc.u32 %v1797, %v1799
        %v1804 = vadd.s32 %v1800, 1
        %v1805 = vsel %vm1803, %v1804, %v1800
        %v1806 = vadd.s32 %v1801, %v1805
        %v1807 = vadd.s32 %v1806, 536870912
        %v1808 = vshrl.u32 %v1807, 30
        %v1809 = vshll.u32 %v1808, 30
        %v1810 = vsub.s32 %v1806, %v1809
        %vm1811 = vcmp.lt.s32.totalorder %v1810, 0
        %v1812 = vsub.s32 0, %v1810
        %v1813 = vsel %vm1811, %v1812, %v1810
        %v1814 = vclz %v1813
        %v1815 = vsub.s32 %v1814, 2
        %vm1816 = vcmp.gt.s32.totalorder 0, %v1815
        %v1817 = vsel %vm1816, 0, %v1815
        %v1818 = vsub.s32 32, %v1817
        %v1819 = vshll.u32 %v1810, %v1817
        %v1820 = vshrl.u32 %v1802, %v1818
        %v1821 = vor.u32 %v1819, %v1820
        %v1822 = vsub.s32 4294967266, %v1817
        %v1823 = vadd.s32 %v1822, 127
        %v1824 = vshll.u32 %v1823, 23
        %v1825 = vor.u32 4788187, %v1824
        %v1826 = vand.u32 2147483647, %v1825
        %v1828 = vcvt.s32.f32 %v1821
        %v1829 = vmul.f32 %v1828, %v1826
        %v1830 = vxor.u32 %v1829, 2147483648
        %v1831 = vsel %vm1748, %v1830, %v1829
        %v1832 = vsub.s32 4, %v1808
        %v1833 = vsel %vm1748, %v1832, %v1808
        %v1834 = vsel %vm1747, %v1431, %v1831
        %v1835 = vsel %vm1747, 0, %v1833
        %v1836 = vcosq.f32.pop %v1834
        %v1837 = vsinq.f32.pop %v1834
        %vm1838 = vweird.f32 %v1431
        %v1839 = vadd.s32 %v1835, 3
        %v1840 = vand.u32 %v1839, 3
        %vm1841 = vcmp.lt.s32.totalorder %v1840, 2
        %vm1842 = vcmp.eq.s32.totalorder %v1840, 0
        %v1843 = vxor.u32 %v1837, 2147483648
        %v1844 = vsel %vm1842, %v1836, %v1843
        %vm1845 = vcmp.eq.s32.totalorder %v1840, 2
        %v1846 = vxor.u32 %v1836, 2147483648
        %v1847 = vsel %vm1845, %v1846, %v1837
        %v1848 = vsel %vm1841, %v1844, %v1847
        %v1849 = vsel %vm1838, nan, %v1848
        %v1850 = vld [vmem:[%s5] sm:$0x7]
        %v1851 = vld [vmem:[%s6] sm:$0x7]
        %1853 = vset.pattern.permute.xlu0 0
        %1854 = vperm.xlu0 %1853, %v1851
        %v1855 = vpop.permute.xlu0 %1854
        %v1858 = vsel %vm807, %v1850, 0
        %1860 = vmatprep.subr.mxu0 0.0
        %1861 = vmatpush1.msra.mxu0 0.0
        %1862 = vmatprep.subr.mxu0 0.0
        %1863 = vmatpush1.msra.mxu0 0.0
        %1864 = vmatprep.subr.mxu0 0.0
        %1865 = vmatpush1.msra.mxu0 0.0
        %1866 = vmatprep.subr.mxu0 0.0
        %1867 = vmatpush1.msra.mxu0 0.0
        %1868 = vmatprep.subr.mxu0 0.0
        %1869 = vmatpush1.msra.mxu0 0.0
        %1870 = vmatprep.subr.mxu0 0.0
        %1871 = vmatpush1.msra.mxu0 0.0
        %1872 = vmatprep.subr.mxu0 0.0
        %1873 = vmatpush1.msra.mxu0 0.0
        %1874 = vmatprep.subr.mxu0 0.0
        %1875 = vmatpush1.msra.mxu0 0.0
        %1876 = vmatprep.subr.mxu0 0.0
        %1877 = vmatpush1.msra.mxu0 0.0
        %1878 = vmatprep.subr.mxu0 0.0
        %1879 = vmatpush1.msra.mxu0 0.0
        %1880 = vmatprep.subr.mxu0 0.0
        %1881 = vmatpush1.msra.mxu0 0.0
        %1882 = vmatprep.subr.mxu0 0.0
        %1883 = vmatpush1.msra.mxu0 0.0
        %1884 = vmatprep.subr.mxu0 0.0
        %v1885 = vand.u32 %v1849, 4294901760
        %1886 = vmatpush1.msra.mxu0 %v1885
        %1887 = vmatprep.subr.mxu0 0.0
        %v1888 = vand.u32 %v1745, 4294901760
        %1889 = vmatpush1.msra.mxu0 %v1888
        %1890 = vmatprep.subr.mxu0 0.0
        %v1891 = vand.u32 %v1641, 4294901760
        %1892 = vmatpush1.msra.mxu0 %v1891
        %1893 = vmatprep.subr.mxu0 0.0
        %v1894 = vand.u32 %v1537, 4294901760
        %1895 = vmatpush1.msra.mxu0 %v1894
        %1896 = vmatprep.subr.mxu0 0.0
        %1897 = vmatpush2.msra.mxu0 0.0
        %1898 = vmatprep.subr.mxu0 0.0
        %1899 = vmatpush2.msra.mxu0 0.0
        %1900 = vmatprep.subr.mxu0 0.0
        %1901 = vmatpush2.msra.mxu0 0.0
        %1902 = vmatprep.subr.mxu0 0.0
        %1903 = vmatpush2.msra.mxu0 0.0
        %1904 = vmatprep.subr.mxu0 0.0
        %1905 = vmatpush2.msra.mxu0 0.0
        %1906 = vmatprep.subr.mxu0 0.0
        %1907 = vmatpush2.msra.mxu0 0.0
        %1908 = vmatprep.subr.mxu0 0.0
        %1909 = vmatpush2.msra.mxu0 0.0
        %1910 = vmatprep.subr.mxu0 0.0
        %1911 = vmatpush2.msra.mxu0 0.0
        %1912 = vmatprep.subr.mxu0 0.0
        %1913 = vmatpush2.msra.mxu0 0.0
        %1914 = vmatprep.subr.mxu0 0.0
        %1915 = vmatpush2.msra.mxu0 0.0
        %1916 = vmatprep.subr.mxu0 0.0
        %1917 = vmatpush2.msra.mxu0 0.0
        %1918 = vmatprep.subr.mxu0 0.0
        %1919 = vmatpush2.msra.mxu0 0.0
        %1920 = vmatprep.subr.mxu0 0.0
        %1921 = vmatpush2.msra.mxu0 0.0
        %1922 = vmatprep.subr.mxu0 0.0
        %1923 = vmatpush2.msra.mxu0 0.0
        %1924 = vmatprep.subr.mxu0 0.0
        %1925 = vmatpush2.msra.mxu0 0.0
        %1926 = vmatprep.subr.mxu0 0.0
        %1927 = vmatpush2.msra.mxu0 0.0
        %1928 = vmatprep.mubr.f32.mxu0 0.0
        %v1929 = vand.u32 %v1858, 4294901760
        %v1930 = vsub.f32 %v1858, %v1929
        %v1931 = vand.u32 %v1930, 4294901760
        %v1932 = vsub.f32 %v1930, %v1931
        %v1933 = vand.u32 %v1932, 4294901760
        %1934 = vmatmul.mubr.f32.gmra.mxu0 %v1933
        %v1935 = vpop.f32.mrf.mxu0
        %v1936 = vadd.f32 %v1855, %v1935
        %v1937 = vpop.f32.mrf.mxu0
        %1938 = vdwg.mxu0
        %1939 = vmatprep.subr.mxu0 0.0
        %1940 = vmatpush1.msra.mxu0 0.0
        %1941 = vmatprep.subr.mxu0 0.0
        %1942 = vmatpush1.msra.mxu0 0.0
        %1943 = vmatprep.subr.mxu0 0.0
        %1944 = vmatpush1.msra.mxu0 0.0
        %1945 = vmatprep.subr.mxu0 0.0
        %1946 = vmatpush1.msra.mxu0 0.0
        %1947 = vmatprep.subr.mxu0 0.0
        %1948 = vmatpush1.msra.mxu0 0.0
        %1949 = vmatprep.subr.mxu0 0.0
        %1950 = vmatpush1.msra.mxu0 0.0
        %1951 = vmatprep.subr.mxu0 0.0
        %1952 = vmatpush1.msra.mxu0 0.0
        %1953 = vmatprep.subr.mxu0 0.0
        %1954 = vmatpush1.msra.mxu0 0.0
        %1955 = vmatprep.subr.mxu0 0.0
        %1956 = vmatpush1.msra.mxu0 0.0
        %1957 = vmatprep.subr.mxu0 0.0
        %1958 = vmatpush1.msra.mxu0 0.0
        %1959 = vmatprep.subr.mxu0 0.0
        %1960 = vmatpush1.msra.mxu0 0.0
        %1961 = vmatprep.subr.mxu0 0.0
        %1962 = vmatpush1.msra.mxu0 0.0
        %1963 = vmatprep.subr.mxu0 0.0
        %v1964 = vand.u32 %v1849, 4294901760
        %v1965 = vsub.f32 %v1849, %v1964
        %v1966 = vand.u32 %v1965, 4294901760
        %v1967 = vsub.f32 %v1965, %v1966
        %v1968 = vand.u32 %v1967, 4294901760
        %1969 = vmatpush1.msra.mxu0 %v1968
        %1970 = vmatprep.subr.mxu0 0.0
        %v1971 = vand.u32 %v1745, 4294901760
        %v1972 = vsub.f32 %v1745, %v1971
        %v1973 = vand.u32 %v1972, 4294901760
        %v1974 = vsub.f32 %v1972, %v1973
        %v1975 = vand.u32 %v1974, 4294901760
        %1976 = vmatpush1.msra.mxu0 %v1975
        %1977 = vmatprep.subr.mxu0 0.0
        %v1978 = vand.u32 %v1641, 4294901760
        %v1979 = vsub.f32 %v1641, %v1978
        %v1980 = vand.u32 %v1979, 4294901760
        %v1981 = vsub.f32 %v1979, %v1980
        %v1982 = vand.u32 %v1981, 4294901760
        %1983 = vmatpush1.msra.mxu0 %v1982
        %1984 = vmatprep.subr.mxu0 0.0
        %v1985 = vand.u32 %v1537, 4294901760
        %v1986 = vsub.f32 %v1537, %v1985
        %v1987 = vand.u32 %v1986, 4294901760
        %v1988 = vsub.f32 %v1986, %v1987
        %v1989 = vand.u32 %v1988, 4294901760
        %1990 = vmatpush1.msra.mxu0 %v1989
        %1991 = vmatprep.subr.mxu0 0.0
        %1992 = vmatpush2.msra.mxu0 0.0
        %1993 = vmatprep.subr.mxu0 0.0
        %1994 = vmatpush2.msra.mxu0 0.0
        %1995 = vmatprep.subr.mxu0 0.0
        %1996 = vmatpush2.msra.mxu0 0.0
        %1997 = vmatprep.subr.mxu0 0.0
        %1998 = vmatpush2.msra.mxu0 0.0
        %1999 = vmatprep.subr.mxu0 0.0
        %2000 = vmatpush2.msra.mxu0 0.0
        %2001 = vmatprep.subr.mxu0 0.0
        %2002 = vmatpush2.msra.mxu0 0.0
        %2003 = vmatprep.subr.mxu0 0.0
        %2004 = vmatpush2.msra.mxu0 0.0
        %2005 = vmatprep.subr.mxu0 0.0
        %2006 = vmatpush2.msra.mxu0 0.0
        %2007 = vmatprep.subr.mxu0 0.0
        %2008 = vmatpush2.msra.mxu0 0.0
        %2009 = vmatprep.subr.mxu0 0.0
        %2010 = vmatpush2.msra.mxu0 0.0
        %2011 = vmatprep.subr.mxu0 0.0
        %2012 = vmatpush2.msra.mxu0 0.0
        %2013 = vmatprep.subr.mxu0 0.0
        %2014 = vmatpush2.msra.mxu0 0.0
        %2015 = vmatprep.subr.mxu0 0.0
        %2016 = vmatpush2.msra.mxu0 0.0
        %2017 = vmatprep.subr.mxu0 0.0
        %2018 = vmatpush2.msra.mxu0 0.0
        %2019 = vmatprep.subr.mxu0 0.0
        %2020 = vmatpush2.msra.mxu0 0.0
        %2021 = vmatprep.subr.mxu0 0.0
        %2022 = vmatpush2.msra.mxu0 0.0
        %2023 = vmatprep.mubr.f32.mxu0 0.0
        %v2024 = vand.u32 %v1858, 4294901760
        %2025 = vmatmul.mubr.f32.gmra.mxu0 %v2024
        %v2026 = vpop.f32.mrf.mxu0
        %v2027 = vadd.f32 %v1936, %v2026
        %v2028 = vpop.f32.mrf.mxu0
        %2029 = vdwg.mxu0
        %2030 = vmatprep.subr.mxu0 0.0
        %2031 = vmatpush1.msra.mxu0 0.0
        %2032 = vmatprep.subr.mxu0 0.0
        %2033 = vmatpush1.msra.mxu0 0.0
        %2034 = vmatprep.subr.mxu0 0.0
        %2035 = vmatpush1.msra.mxu0 0.0
        %2036 = vmatprep.subr.mxu0 0.0
        %2037 = vmatpush1.msra.mxu0 0.0
        %2038 = vmatprep.subr.mxu0 0.0
        %2039 = vmatpush1.msra.mxu0 0.0
        %2040 = vmatprep.subr.mxu0 0.0
        %2041 = vmatpush1.msra.mxu0 0.0
        %2042 = vmatprep.subr.mxu0 0.0
        %2043 = vmatpush1.msra.mxu0 0.0
        %2044 = vmatprep.subr.mxu0 0.0
        %2045 = vmatpush1.msra.mxu0 0.0
        %2046 = vmatprep.subr.mxu0 0.0
        %2047 = vmatpush1.msra.mxu0 0.0
        %2048 = vmatprep.subr.mxu0 0.0
        %2049 = vmatpush1.msra.mxu0 0.0
        %2050 = vmatprep.subr.mxu0 0.0
        %2051 = vmatpush1.msra.mxu0 0.0
        %2052 = vmatprep.subr.mxu0 0.0
        %2053 = vmatpush1.msra.mxu0 0.0
        %2054 = vmatprep.subr.mxu0 0.0
        %v2055 = vand.u32 %v1849, 4294901760
        %v2056 = vsub.f32 %v1849, %v2055
        %2057 = vmatpush1.msra.mxu0 %v2056
        %2058 = vmatprep.subr.mxu0 0.0
        %v2059 = vand.u32 %v1745, 4294901760
        %v2060 = vsub.f32 %v1745, %v2059
        %2061 = vmatpush1.msra.mxu0 %v2060
        %2062 = vmatprep.subr.mxu0 0.0
        %v2063 = vand.u32 %v1641, 4294901760
        %v2064 = vsub.f32 %v1641, %v2063
        %2065 = vmatpush1.msra.mxu0 %v2064
        %2066 = vmatprep.subr.mxu0 0.0
        %v2067 = vand.u32 %v1537, 4294901760
        %v2068 = vsub.f32 %v1537, %v2067
        %2069 = vmatpush1.msra.mxu0 %v2068
        %2070 = vmatprep.subr.mxu0 0.0
        %2071 = vmatpush2.msra.mxu0 0.0
        %2072 = vmatprep.subr.mxu0 0.0
        %2073 = vmatpush2.msra.mxu0 0.0
        %2074 = vmatprep.subr.mxu0 0.0
        %2075 = vmatpush2.msra.mxu0 0.0
        %2076 = vmatprep.subr.mxu0 0.0
        %2077 = vmatpush2.msra.mxu0 0.0
        %2078 = vmatprep.subr.mxu0 0.0
        %2079 = vmatpush2.msra.mxu0 0.0
        %2080 = vmatprep.subr.mxu0 0.0
        %2081 = vmatpush2.msra.mxu0 0.0
        %2082 = vmatprep.subr.mxu0 0.0
        %2083 = vmatpush2.msra.mxu0 0.0
        %2084 = vmatprep.subr.mxu0 0.0
        %2085 = vmatpush2.msra.mxu0 0.0
        %2086 = vmatprep.subr.mxu0 0.0
        %2087 = vmatpush2.msra.mxu0 0.0
        %2088 = vmatprep.subr.mxu0 0.0
        %2089 = vmatpush2.msra.mxu0 0.0
        %2090 = vmatprep.subr.mxu0 0.0
        %2091 = vmatpush2.msra.mxu0 0.0
        %2092 = vmatprep.subr.mxu0 0.0
        %2093 = vmatpush2.msra.mxu0 0.0
        %2094 = vmatprep.subr.mxu0 0.0
        %2095 = vmatpush2.msra.mxu0 0.0
        %2096 = vmatprep.subr.mxu0 0.0
        %2097 = vmatpush2.msra.mxu0 0.0
        %2098 = vmatprep.subr.mxu0 0.0
        %2099 = vmatpush2.msra.mxu0 0.0
        %2100 = vmatprep.subr.mxu0 0.0
        %2101 = vmatpush2.msra.mxu0 0.0
        %2102 = vmatprep.mubr.f32.mxu0 0.0
        %v2103 = vand.u32 %v1858, 4294901760
        %v2104 = vsub.f32 %v1858, %v2103
        %2105 = vmatmul.mubr.f32.gmra.mxu0 %v2104
        %v2106 = vpop.f32.mrf.mxu0
        %v2107 = vadd.f32 %v2027, %v2106
        %v2108 = vpop.f32.mrf.mxu0
        %2109 = vdwg.mxu0
        %2110 = vmatprep.subr.mxu0 0.0
        %2111 = vmatpush1.msra.mxu0 0.0
        %2112 = vmatprep.subr.mxu0 0.0
        %2113 = vmatpush1.msra.mxu0 0.0
        %2114 = vmatprep.subr.mxu0 0.0
        %2115 = vmatpush1.msra.mxu0 0.0
        %2116 = vmatprep.subr.mxu0 0.0
        %2117 = vmatpush1.msra.mxu0 0.0
        %2118 = vmatprep.subr.mxu0 0.0
        %2119 = vmatpush1.msra.mxu0 0.0
        %2120 = vmatprep.subr.mxu0 0.0
        %2121 = vmatpush1.msra.mxu0 0.0
        %2122 = vmatprep.subr.mxu0 0.0
        %2123 = vmatpush1.msra.mxu0 0.0
        %2124 = vmatprep.subr.mxu0 0.0
        %2125 = vmatpush1.msra.mxu0 0.0
        %2126 = vmatprep.subr.mxu0 0.0
        %2127 = vmatpush1.msra.mxu0 0.0
        %2128 = vmatprep.subr.mxu0 0.0
        %2129 = vmatpush1.msra.mxu0 0.0
        %2130 = vmatprep.subr.mxu0 0.0
        %2131 = vmatpush1.msra.mxu0 0.0
        %2132 = vmatprep.subr.mxu0 0.0
        %2133 = vmatpush1.msra.mxu0 0.0
        %2134 = vmatprep.subr.mxu0 0.0
        %v2135 = vand.u32 %v1849, 4294901760
        %2136 = vmatpush1.msra.mxu0 %v2135
        %2137 = vmatprep.subr.mxu0 0.0
        %v2138 = vand.u32 %v1745, 4294901760
        %2139 = vmatpush1.msra.mxu0 %v2138
        %2140 = vmatprep.subr.mxu0 0.0
        %v2141 = vand.u32 %v1641, 4294901760
        %2142 = vmatpush1.msra.mxu0 %v2141
        %2143 = vmatprep.subr.mxu0 0.0
        %v2144 = vand.u32 %v1537, 4294901760
        %2145 = vmatpush1.msra.mxu0 %v2144
        %2146 = vmatprep.subr.mxu0 0.0
        %2147 = vmatpush2.msra.mxu0 0.0
        %2148 = vmatprep.subr.mxu0 0.0
        %2149 = vmatpush2.msra.mxu0 0.0
        %2150 = vmatprep.subr.mxu0 0.0
        %2151 = vmatpush2.msra.mxu0 0.0
        %2152 = vmatprep.subr.mxu0 0.0
        %2153 = vmatpush2.msra.mxu0 0.0
        %2154 = vmatprep.subr.mxu0 0.0
        %2155 = vmatpush2.msra.mxu0 0.0
        %2156 = vmatprep.subr.mxu0 0.0
        %2157 = vmatpush2.msra.mxu0 0.0
        %2158 = vmatprep.subr.mxu0 0.0
        %2159 = vmatpush2.msra.mxu0 0.0
        %2160 = vmatprep.subr.mxu0 0.0
        %2161 = vmatpush2.msra.mxu0 0.0
        %2162 = vmatprep.subr.mxu0 0.0
        %2163 = vmatpush2.msra.mxu0 0.0
        %2164 = vmatprep.subr.mxu0 0.0
        %2165 = vmatpush2.msra.mxu0 0.0
        %2166 = vmatprep.subr.mxu0 0.0
        %2167 = vmatpush2.msra.mxu0 0.0
        %2168 = vmatprep.subr.mxu0 0.0
        %2169 = vmatpush2.msra.mxu0 0.0
        %2170 = vmatprep.subr.mxu0 0.0
        %2171 = vmatpush2.msra.mxu0 0.0
        %2172 = vmatprep.subr.mxu0 0.0
        %2173 = vmatpush2.msra.mxu0 0.0
        %2174 = vmatprep.subr.mxu0 0.0
        %2175 = vmatpush2.msra.mxu0 0.0
        %2176 = vmatprep.subr.mxu0 0.0
        %2177 = vmatpush2.msra.mxu0 0.0
        %2178 = vmatprep.mubr.f32.mxu0 0.0
        %v2179 = vand.u32 %v1858, 4294901760
        %v2180 = vsub.f32 %v1858, %v2179
        %v2181 = vand.u32 %v2180, 4294901760
        %2182 = vmatmul.mubr.f32.gmra.mxu0 %v2181
        %v2183 = vpop.f32.mrf.mxu0
        %v2184 = vadd.f32 %v2107, %v2183
        %v2185 = vpop.f32.mrf.mxu0
        %2186 = vdwg.mxu0
        %2187 = vmatprep.subr.mxu0 0.0
        %2188 = vmatpush1.msra.mxu0 0.0
        %2189 = vmatprep.subr.mxu0 0.0
        %2190 = vmatpush1.msra.mxu0 0.0
        %2191 = vmatprep.subr.mxu0 0.0
        %2192 = vmatpush1.msra.mxu0 0.0
        %2193 = vmatprep.subr.mxu0 0.0
        %2194 = vmatpush1.msra.mxu0 0.0
        %2195 = vmatprep.subr.mxu0 0.0
        %2196 = vmatpush1.msra.mxu0 0.0
        %2197 = vmatprep.subr.mxu0 0.0
        %2198 = vmatpush1.msra.mxu0 0.0
        %2199 = vmatprep.subr.mxu0 0.0
        %2200 = vmatpush1.msra.mxu0 0.0
        %2201 = vmatprep.subr.mxu0 0.0
        %2202 = vmatpush1.msra.mxu0 0.0
        %2203 = vmatprep.subr.mxu0 0.0
        %2204 = vmatpush1.msra.mxu0 0.0
        %2205 = vmatprep.subr.mxu0 0.0
        %2206 = vmatpush1.msra.mxu0 0.0
        %2207 = vmatprep.subr.mxu0 0.0
        %2208 = vmatpush1.msra.mxu0 0.0
        %2209 = vmatprep.subr.mxu0 0.0
        %2210 = vmatpush1.msra.mxu0 0.0
        %2211 = vmatprep.subr.mxu0 0.0
        %v2212 = vand.u32 %v1849, 4294901760
        %v2213 = vsub.f32 %v1849, %v2212
        %v2214 = vand.u32 %v2213, 4294901760
        %2215 = vmatpush1.msra.mxu0 %v2214
        %2216 = vmatprep.subr.mxu0 0.0
        %v2217 = vand.u32 %v1745, 4294901760
        %v2218 = vsub.f32 %v1745, %v2217
        %v2219 = vand.u32 %v2218, 4294901760
        %2220 = vmatpush1.msra.mxu0 %v2219
        %2221 = vmatprep.subr.mxu0 0.0
        %v2222 = vand.u32 %v1641, 4294901760
        %v2223 = vsub.f32 %v1641, %v2222
        %v2224 = vand.u32 %v2223, 4294901760
        %2225 = vmatpush1.msra.mxu0 %v2224
        %2226 = vmatprep.subr.mxu0 0.0
        %v2227 = vand.u32 %v1537, 4294901760
        %v2228 = vsub.f32 %v1537, %v2227
        %v2229 = vand.u32 %v2228, 4294901760
        %2230 = vmatpush1.msra.mxu0 %v2229
        %2231 = vmatprep.subr.mxu0 0.0
        %2232 = vmatpush2.msra.mxu0 0.0
        %2233 = vmatprep.subr.mxu0 0.0
        %2234 = vmatpush2.msra.mxu0 0.0
        %2235 = vmatprep.subr.mxu0 0.0
        %2236 = vmatpush2.msra.mxu0 0.0
        %2237 = vmatprep.subr.mxu0 0.0
        %2238 = vmatpush2.msra.mxu0 0.0
        %2239 = vmatprep.subr.mxu0 0.0
        %2240 = vmatpush2.msra.mxu0 0.0
        %2241 = vmatprep.subr.mxu0 0.0
        %2242 = vmatpush2.msra.mxu0 0.0
        %2243 = vmatprep.subr.mxu0 0.0
        %2244 = vmatpush2.msra.mxu0 0.0
        %2245 = vmatprep.subr.mxu0 0.0
        %2246 = vmatpush2.msra.mxu0 0.0
        %2247 = vmatprep.subr.mxu0 0.0
        %2248 = vmatpush2.msra.mxu0 0.0
        %2249 = vmatprep.subr.mxu0 0.0
        %2250 = vmatpush2.msra.mxu0 0.0
        %2251 = vmatprep.subr.mxu0 0.0
        %2252 = vmatpush2.msra.mxu0 0.0
        %2253 = vmatprep.subr.mxu0 0.0
        %2254 = vmatpush2.msra.mxu0 0.0
        %2255 = vmatprep.subr.mxu0 0.0
        %2256 = vmatpush2.msra.mxu0 0.0
        %2257 = vmatprep.subr.mxu0 0.0
        %2258 = vmatpush2.msra.mxu0 0.0
        %2259 = vmatprep.subr.mxu0 0.0
        %2260 = vmatpush2.msra.mxu0 0.0
        %2261 = vmatprep.subr.mxu0 0.0
        %2262 = vmatpush2.msra.mxu0 0.0
        %2263 = vmatprep.mubr.f32.mxu0 0.0
        %v2264 = vand.u32 %v1858, 4294901760
        %2265 = vmatmul.mubr.f32.gmra.mxu0 %v2264
        %v2266 = vpop.f32.mrf.mxu0
        %v2267 = vadd.f32 %v2184, %v2266
        %v2268 = vpop.f32.mrf.mxu0
        %2269 = vdwg.mxu0
        %2270 = vmatprep.subr.mxu0 0.0
        %2271 = vmatpush1.msra.mxu0 0.0
        %2272 = vmatprep.subr.mxu0 0.0
        %2273 = vmatpush1.msra.mxu0 0.0
        %2274 = vmatprep.subr.mxu0 0.0
        %2275 = vmatpush1.msra.mxu0 0.0
        %2276 = vmatprep.subr.mxu0 0.0
        %2277 = vmatpush1.msra.mxu0 0.0
        %2278 = vmatprep.subr.mxu0 0.0
        %2279 = vmatpush1.msra.mxu0 0.0
        %2280 = vmatprep.subr.mxu0 0.0
        %2281 = vmatpush1.msra.mxu0 0.0
        %2282 = vmatprep.subr.mxu0 0.0
        %2283 = vmatpush1.msra.mxu0 0.0
        %2284 = vmatprep.subr.mxu0 0.0
        %2285 = vmatpush1.msra.mxu0 0.0
        %2286 = vmatprep.subr.mxu0 0.0
        %2287 = vmatpush1.msra.mxu0 0.0
        %2288 = vmatprep.subr.mxu0 0.0
        %2289 = vmatpush1.msra.mxu0 0.0
        %2290 = vmatprep.subr.mxu0 0.0
        %2291 = vmatpush1.msra.mxu0 0.0
        %2292 = vmatprep.subr.mxu0 0.0
        %2293 = vmatpush1.msra.mxu0 0.0
        %2294 = vmatprep.subr.mxu0 0.0
        %v2295 = vand.u32 %v1849, 4294901760
        %2296 = vmatpush1.msra.mxu0 %v2295
        %2297 = vmatprep.subr.mxu0 0.0
        %v2298 = vand.u32 %v1745, 4294901760
        %2299 = vmatpush1.msra.mxu0 %v2298
        %2300 = vmatprep.subr.mxu0 0.0
        %v2301 = vand.u32 %v1641, 4294901760
        %2302 = vmatpush1.msra.mxu0 %v2301
        %2303 = vmatprep.subr.mxu0 0.0
        %v2304 = vand.u32 %v1537, 4294901760
        %2305 = vmatpush1.msra.mxu0 %v2304
        %2306 = vmatprep.subr.mxu0 0.0
        %2307 = vmatpush2.msra.mxu0 0.0
        %2308 = vmatprep.subr.mxu0 0.0
        %2309 = vmatpush2.msra.mxu0 0.0
        %2310 = vmatprep.subr.mxu0 0.0
        %2311 = vmatpush2.msra.mxu0 0.0
        %2312 = vmatprep.subr.mxu0 0.0
        %2313 = vmatpush2.msra.mxu0 0.0
        %2314 = vmatprep.subr.mxu0 0.0
        %2315 = vmatpush2.msra.mxu0 0.0
        %2316 = vmatprep.subr.mxu0 0.0
        %2317 = vmatpush2.msra.mxu0 0.0
        %2318 = vmatprep.subr.mxu0 0.0
        %2319 = vmatpush2.msra.mxu0 0.0
        %2320 = vmatprep.subr.mxu0 0.0
        %2321 = vmatpush2.msra.mxu0 0.0
        %2322 = vmatprep.subr.mxu0 0.0
        %2323 = vmatpush2.msra.mxu0 0.0
        %2324 = vmatprep.subr.mxu0 0.0
        %2325 = vmatpush2.msra.mxu0 0.0
        %2326 = vmatprep.subr.mxu0 0.0
        %2327 = vmatpush2.msra.mxu0 0.0
        %2328 = vmatprep.subr.mxu0 0.0
        %2329 = vmatpush2.msra.mxu0 0.0
        %2330 = vmatprep.subr.mxu0 0.0
        %2331 = vmatpush2.msra.mxu0 0.0
        %2332 = vmatprep.subr.mxu0 0.0
        %2333 = vmatpush2.msra.mxu0 0.0
        %2334 = vmatprep.subr.mxu0 0.0
        %2335 = vmatpush2.msra.mxu0 0.0
        %2336 = vmatprep.subr.mxu0 0.0
        %2337 = vmatpush2.msra.mxu0 0.0
        %2338 = vmatprep.mubr.f32.mxu0 0.0
        %v2339 = vand.u32 %v1858, 4294901760
        %2340 = vmatmul.mubr.f32.gmra.mxu0 %v2339
        %v2341 = vpop.f32.mrf.mxu0
        %v2342 = vadd.f32 %v2267, %v2341
        %v2343 = vpop.f32.mrf.mxu0
        %2344 = vdwg.mxu0
        %2345 = vst [vmem:[%s269] sm:$0x7] %v2342
        %s2346 = sand.u32 %s181, 1
        %s2347 = scalar_lea.sflag [#allocation3], %s2346
        %s2348 = sand.u32 %s181, 1
        %s2349 = smul.addr %s2348, 4
        %s2350 = scalar_lea.vmem [#allocation2], %s2349
        // Predicated region
        $region49: #{siren_forward_pallas.1} parent=47 // pred_check
          %p2351 = pneg %p191
        $region50: #{siren_forward_pallas.1} parent=47 // pred_check_branch
          %2353 = sbr.rel (%p2351) target = $region52
        $region51: #{siren_forward_pallas.1} parent=47 // pred_region
          %s2355 = ssub.s32 64, 64
          %2356 = vsyncadd %s2347, %s2355
          %s2357 = smul.addr %s21, 64
          %s2358 = scalar_lea.hbm %s7, %s2357
          %s2360 = sshll.u32 %s2350, 4
          %s2361 = int_to_ptr.vmem [resolvable:$true] %s2360
          %2363 = dma.vmem_to_hbm [thread:$0]  %s2361, 64, %s2358, %s2347
        $region52: #{siren_forward_pallas.1} parent=47 // pred_fallthru
          _
      $region48: #{siren_forward_pallas.1} parent=5 // pred_fallthru
        _
      %p2364 = scmp.le.s32.totalorder 2, %s16
      // Predicated region
      $region53: #{siren_forward_pallas.1} parent=5 // pred_check
        %p2365 = pneg %p2364
      $region54: #{siren_forward_pallas.1} parent=5 // pred_check_branch
        %2367 = sbr.rel (%p2365) target = $region56
      $region55: #{siren_forward_pallas.1} parent=5 // pred_region
        %s2368 = ssub.s32 %s16, 2
        // Predicated region
        $region57: #{siren_forward_pallas.1} parent=55 // pred_check
          %p2369 = pneg %p197
        $region58: #{siren_forward_pallas.1} parent=55 // pred_check_branch
          %2371 = sbr.rel (%p2369) target = $region60
        $region59: #{siren_forward_pallas.1} parent=55 // pred_region
          %s2372 = sand.u32 %s182, 1
          %s2373 = scalar_lea.sflag [#allocation3], %s2372
          %s2374 = sand.u32 %s182, 1
          %s2375 = smul.addr %s2374, 4
          %s2376 = scalar_lea.vmem [#allocation2], %s2375
          %2377 = dma.done %s2373, 64
        $region60: #{siren_forward_pallas.1} parent=55 // pred_fallthru
          _
      $region56: #{siren_forward_pallas.1} parent=5 // pred_fallthru
        _
    $region6: #{siren_forward_pallas.1} parent=1 // loop_footer
      %s20 = sadd.s32 1, %s16
    $region7: #{siren_forward_pallas.1} parent=1 // loop_footer_branch
      %15 = sbr.rel target = $region3
    $region8: #{siren_forward_pallas.1} parent=1 // loop_exit
      _
    %2378 = vsyncpa [#allocation3], 1
    %s2379 = scalar_lea.sflag [#allocation3], 1
    %2380 = vsyncpa %s2379, 1

</llo_original>
